<compile_context>
chip_gen: v6e
topology: v6e:2x2x1
jax: 0.10.0
libtpu: 0.0.40
codegen_flags: <defaults>
</compile_context>

<pallas_src>
import functools

import jax
import jax.numpy as jnp
from jax.experimental import pallas as pl
from jax.experimental.pallas import tpu as pltpu


# ----------------------------------------------------------------------------
# Tiling / budget heuristics
# ----------------------------------------------------------------------------
def _vmem_cap_bytes():
    try:
        return int(pltpu.get_tpu_info().vmem_capacity_bytes)
    except Exception:
        return 128 * 1024 * 1024


def _pick_batch_block(n_batch, seq_len, max_rows=512):
    """nb batch elements per grid step: rows = nb*L sublane-aligned, <= max_rows,
    and (when possible) leaving >= 2 grid steps so megacore (v7x) can shard."""
    valid = []
    for nb in range(1, n_batch + 1):
        if n_batch % nb:
            continue
        rows = nb * seq_len
        if nb != n_batch and rows % 8:
            continue                       # second-to-last block dim must be 8-aligned
        if rows > max(max_rows, seq_len):
            continue
        valid.append(nb)
    if not valid:
        return n_batch
    multi = [nb for nb in valid if n_batch // nb >= 2]
    return max(multi) if multi else max(valid)


def _pick_ff_chunk(dff, max_chunk=2048):
    """Largest 128-aligned divisor of the MLP hidden dim that is <= max_chunk."""
    if dff <= max_chunk:
        return dff
    best = dff
    for c in range(128, max_chunk + 1, 128):
        if dff % c == 0:
            best = c
    return best


def _weight_buffer_count(rows, d_model):
    """2 (double-buffer => next-layer weight prefetch) unless VMEM-tight."""
    w_layer = 24 * d_model * d_model          # bf16 matmul weights per layer
    act = rows * d_model * 64                 # generous activation estimate
    return 2 if (2 * w_layer + act) < 0.7 * _vmem_cap_bytes() else 1


def _vmem_limit_bytes(rows, d_model, nb, ff_chunk, w_buffers):
    """Explicit scoped-VMEM budget from buffer accounting (review item)."""
    w_layer = 24 * d_model * d_model          # bf16 matmul weights per layer
    p_layer = 4 * 13 * d_model                # f32 LN / bias params (approx)
    weights = w_buffers * (w_layer + p_layer)
    io = 2 * (2 * rows * d_model * 4) + 2 * (nb * d_model * 4)
    inter = rows * d_model * 32 + rows * ff_chunk * 8
    est = weights + io + inter
    return int(min(max(1.5 * est, 32 * 1024 * 1024), 0.9 * _vmem_cap_bytes()))


# ----------------------------------------------------------------------------
# Fused transformer kernel: grid = (row_blocks, LAYERS)
# ----------------------------------------------------------------------------
def transformer_kernel(x_ref, ln1w_ref, ln1b_ref, wqkv_ref, bqkv_ref,
                       wout_ref, bout_ref, ln2w_ref, ln2b_ref,
                       wfc_ref, bfc_ref, wproj_ref, bproj_ref,
                       o_ref, tok0_ref, attn_sc,
                       *, n_head, seq_len, nb, ff_chunk):
    layer = pl.program_id(1)
    rows, d_model = o_ref.shape
    dh = d_model // n_head
    dff = wfc_ref.shape[-1]

    # Residual stream is carried in the resident output block across the layer axis.
    @pl.when(layer == 0)
    def _():
        o_ref[...] = x_ref[...]

    x = o_ref[...].astype(jnp.float32)                     # (rows, D)

    def layernorm(v, w, b):                                 # fp32 LayerNorm (eps=1e-5)
        mu = jnp.mean(v, axis=-1, keepdims=True)
        var = jnp.mean((v - mu) ** 2, axis=-1, keepdims=True)
        return (v - mu) * jax.lax.rsqrt(var + 1e-5) * w + b

    # ---- attention branch ---------------------------------------------------
    ln1 = layernorm(x, ln1w_ref[0], ln1b_ref[0])
    # Pre-transposed (D,3D) bf16 weight, q-scale folded in. Keep only bf16 qkv live.
    qkv = (jnp.dot(ln1.astype(jnp.bfloat16), wqkv_ref[...],
                   preferred_element_type=jnp.float32)
           + bqkv_ref[0]).astype(jnp.bfloat16)              # (rows, 3D)

    contract_last = (((1,), (1,)), ((), ()))                # QK^T without explicit .T
    for b in range(nb):                                     # static loop: batch block
        r0 = b * seq_len
        for h in range(n_head):                             # static loop: heads
            c0 = h * dh
            q = qkv[r0:r0 + seq_len, c0:c0 + dh]
            k = qkv[r0:r0 + seq_len, d_model + c0:d_model + c0 + dh]
            v = qkv[r0:r0 + seq_len, 2 * d_model + c0:2 * d_model + c0 + dh]
            s = jax.lax.dot_general(q, k, contract_last,
                                    preferred_element_type=jnp.float32)   # (L, L)
            s = s - jnp.max(s, axis=-1, keepdims=True)
            p = jnp.exp(s)
            p = p * pl.reciprocal(jnp.sum(p, axis=-1, keepdims=True), approx=True)
            o_h = jnp.dot(p.astype(jnp.bfloat16), v,
                          preferred_element_type=jnp.float32)             # (L, dh)
            # Head output into its column slab of the (rows, D) scratch.
            attn_sc[r0:r0 + seq_len, c0:c0 + dh] = o_h.astype(jnp.bfloat16)

    # ONE K=D out-projection matmul for the whole batch block.
    attn = jnp.dot(attn_sc[...], wout_ref[...],
                   preferred_element_type=jnp.float32) + bout_ref[0]
    x = x + attn

    # ---- MLP branch (hidden dimension chunked) -------------------------------
    ln2 = layernorm(x, ln2w_ref[0], ln2b_ref[0]).astype(jnp.bfloat16)
    bfc = bfc_ref[0]
    h2 = jnp.zeros((rows, d_model), jnp.float32)
    for c0 in range(0, dff, ff_chunk):
        h1_c = jnp.dot(ln2, wfc_ref[:, c0:c0 + ff_chunk],
                       preferred_element_type=jnp.float32) + bfc[c0:c0 + ff_chunk]
        g_c = h1_c * jax.nn.sigmoid(1.702 * h1_c)           # QuickGELU (f32)
        h2 = h2 + jnp.dot(g_c.astype(jnp.bfloat16), wproj_ref[c0:c0 + ff_chunk, :],
                          preferred_element_type=jnp.float32)
    x = x + h2 + bproj_ref[0]

    # Carry the residual stream; emit this layer's token-0 rows (x[0] seq-first).
    o_ref[...] = x.astype(o_ref.dtype)
    for b in range(nb):
        r0 = b * seq_len
        tok0_ref[b:b + 1, :] = x[r0:r0 + 1, :].astype(tok0_ref.dtype)


def transformer_pallas(x_lnd, stacked, n_head):
    """Matches Transformer.forward: x (L, N, D) -> (out_dict, x)."""
    L, N, D = x_lnd.shape
    n_layers = stacked["ln1_w"].shape[0]
    dff = 4 * D
    nb = _pick_batch_block(N, L)
    rows = nb * L
    M = N * L
    num_blocks = M // rows
    ff_chunk = _pick_ff_chunk(dff)
    w_buffers = _weight_buffer_count(rows, D)

    x2d = jnp.transpose(x_lnd, (1, 0, 2)).reshape(M, D)     # batch-major, lane-dense

    def wspec(shape, index_map):
        # Default double-buffer = next-layer prefetch; drop to 1 buffer if VMEM-tight.
        if w_buffers == 2:
            return pl.BlockSpec(shape, index_map)
        return pl.BlockSpec(shape, index_map, pipeline_mode=pl.Buffered(w_buffers))

    lmap = lambda i, l: (l, 0, 0)
    in_specs = [
        pl.BlockSpec((rows, D), lambda i, l: (i, 0)),                      # x block
        pl.BlockSpec((None, 1, D), lmap), pl.BlockSpec((None, 1, D), lmap),     # ln1 w,b
        wspec((None, D, 3 * D), lmap), pl.BlockSpec((None, 1, 3 * D), lmap),    # qkv W^T,b
        wspec((None, D, D), lmap), pl.BlockSpec((None, 1, D), lmap),            # out W^T,b
        pl.BlockSpec((None, 1, D), lmap), pl.BlockSpec((None, 1, D), lmap),     # ln2 w,b
        wspec((None, D, dff), lmap), pl.BlockSpec((None, 1, dff), lmap),        # fc  W^T,b
        wspec((None, dff, D), lmap), pl.BlockSpec((None, 1, D), lmap),          # proj W^T,b
    ]
    out_specs = [
        pl.BlockSpec((rows, D), lambda i, l: (i, 0)),                      # final x (carried)
        pl.BlockSpec((None, None, nb, D), lambda i, l: (l, i, 0, 0)),      # per-layer token-0
    ]
    out_shapes = [
        jax.ShapeDtypeStruct((M, D), x_lnd.dtype),
        jax.ShapeDtypeStruct((n_layers, num_blocks, nb, D), x_lnd.dtype),
    ]

    kernel = functools.partial(transformer_kernel, n_head=n_head, seq_len=L,
                               nb=nb, ff_chunk=ff_chunk)
    x_out, tok0 = pl.pallas_call(
        kernel,
        out_shape=out_shapes,
        grid=(num_blocks, n_layers),
        in_specs=in_specs,
        out_specs=out_specs,
        scratch_shapes=[pltpu.VMEM((rows, D), jnp.bfloat16)],
        compiler_params=pltpu.CompilerParams(
            dimension_semantics=("parallel", "arbitrary"),
            vmem_limit_bytes=_vmem_limit_bytes(rows, D, nb, ff_chunk, w_buffers)),
    )(x2d,
      stacked["ln1_w"], stacked["ln1_b"], stacked["wqkv_t"], stacked["bqkv"],
      stacked["wout_t"], stacked["bout"], stacked["ln2_w"], stacked["ln2_b"],
      stacked["wfc_t"], stacked["bfc"], stacked["wproj_t"], stacked["bproj"])

    tok0 = tok0.reshape(n_layers, N, D)
    out = {"layer" + str(i): tok0[i] for i in range(n_layers)}
    x_final = jnp.transpose(x_out.reshape(N, L, D), (1, 0, 2))   # back to (L,N,D)
    return out, x_final


# ----------------------------------------------------------------------------
# Parameter construction (PyTorch layout) + kernel-layout preparation
# ----------------------------------------------------------------------------
def init_params(key, width, layers):
    params = []
    for _ in range(layers):
        keys = jax.random.split(key, 7)
        key = keys[0]
        scale = 0.02
        p = {
            "ln1_w": jnp.ones((1, width), jnp.float32),
            "ln1_b": jnp.zeros((1, width), jnp.float32),
            "in_w": scale * jax.random.normal(keys[1], (3 * width, width), jnp.float32),
            "in_b": jnp.zeros((1, 3 * width), jnp.float32),
            "out_w": scale * jax.random.normal(keys[2], (width, width), jnp.float32),
            "out_b": jnp.zeros((1, width), jnp.float32),
            "ln2_w": jnp.ones((1, width), jnp.float32),
            "ln2_b": jnp.zeros((1, width), jnp.float32),
            "fc_w": scale * jax.random.normal(keys[3], (4 * width, width), jnp.float32),
            "fc_b": 0.01 * jax.random.normal(keys[4], (1, 4 * width), jnp.float32),
            "proj_w": scale * jax.random.normal(keys[5], (width, 4 * width), jnp.float32),
            "proj_b": 0.01 * jax.random.normal(keys[6], (1, width), jnp.float32),
        }
        params.append(p)
    return params


def prepare_kernel_params(torch_params, n_head):
    """Stack per-layer params into (LAYERS, ...) tensors, pre-transpose weights,
    fold q scale, cast matmul weights to bf16."""
    D = torch_params[0]["ln1_w"].shape[-1]
    dh = D // n_head
    qscale = jnp.concatenate([jnp.full((D,), dh ** -0.5, jnp.float32),
                              jnp.ones((2 * D,), jnp.float32)])
    keys = ("ln1_w", "ln1_b", "wqkv_t", "bqkv", "wout_t", "bout",
            "ln2_w", "ln2_b", "wfc_t", "bfc", "wproj_t", "bproj")
    stacked = {k: [] for k in keys}
    for p in torch_params:
        stacked["ln1_w"].append(p["ln1_w"])
        stacked["ln1_b"].append(p["ln1_b"])
        stacked["wqkv_t"].append((p["in_w"].T * qscale[None, :]).astype(jnp.bfloat16))
        stacked["bqkv"].append(p["in_b"] * qscale[None, :])
        stacked["wout_t"].append(p["out_w"].T.astype(jnp.bfloat16))
        stacked["bout"].append(p["out_b"])
        stacked["ln2_w"].append(p["ln2_w"])
        stacked["ln2_b"].append(p["ln2_b"])
        stacked["wfc_t"].append(p["fc_w"].T.astype(jnp.bfloat16))
        stacked["bfc"].append(p["fc_b"])
        stacked["wproj_t"].append(p["proj_w"].T.astype(jnp.bfloat16))
        stacked["bproj"].append(p["proj_b"])
    return {k: jnp.stack(v, axis=0) for k, v in stacked.items()}


# ----------------------------------------------------------------------------
# Pure-JAX f32 reference (true module semantics) for correctness check
# ----------------------------------------------------------------------------
def ref_forward(x_lnd, params, n_head):
    def ln(v, w, b):
        mu = v.mean(-1, keepdims=True)
        var = ((v - mu) ** 2).mean(-1, keepdims=True)
        return (v - mu) * jax.lax.rsqrt(var + 1e-5) * w[0] + b[0]

    x = jnp.transpose(x_lnd, (1, 0, 2))
    D = x.shape[-1]
    dh = D // n_head
    out = {}
    for idx, p in enumerate(params):
        l1 = ln(x, p["ln1_w"], p["ln1_b"])
        qkv = l1 @ p["in_w"].T + p["in_b"][0]
        q, k, v = qkv[..., :D] * dh ** -0.5, qkv[..., D:2 * D], qkv[..., 2 * D:]
        heads = []
        for h in range(n_head):
            sl = slice(h * dh, (h + 1) * dh)
            s = jnp.einsum("nqd,nkd->nqk", q[..., sl], k[..., sl])
            pr = jax.nn.softmax(s, axis=-1)
            heads.append(jnp.einsum("nqk,nkd->nqd", pr, v[..., sl]))
        attn = jnp.concatenate(heads, -1) @ p["out_w"].T + p["out_b"][0]
        x = x + attn
        l2 = ln(x, p["ln2_w"], p["ln2_b"])
        h1 = l2 @ p["fc_w"].T + p["fc_b"][0]
        g = h1 * jax.nn.sigmoid(1.702 * h1)
        x = x + g @ p["proj_w"].T + p["proj_b"][0]
        out["layer" + str(idx)] = x[:, 0, :]
    return out, jnp.transpose(x, (1, 0, 2))


if __name__ == "__main__":
    L, N, D, HEADS, LAYERS = 8, 2, 32, 4, 2
    key = jax.random.PRNGKey(0)
    kx, kp = jax.random.split(key)
    x = jax.random.normal(kx, (L, N, D), jnp.float32)       # (seq, batch, width)
    torch_params = init_params(kp, D, LAYERS)
    kparams = prepare_kernel_params(torch_params, HEADS)

    out_dict, x_final = transformer_pallas(x, kparams, HEADS)
    x_final = jax.block_until_ready(x_final)
    for v in out_dict.values():
        jax.block_until_ready(v)

    ref_dict, ref_final = ref_forward(x, torch_params, HEADS)
    # bf16 matmul operands / f32 accumulation => compare against f32 ref loosely.
    err = float(jnp.max(jnp.abs(x_final - ref_final)))
    assert jnp.allclose(x_final, ref_final, atol=2e-2, rtol=2e-2), err
    for kname in out_dict:
        assert jnp.allclose(out_dict[kname], ref_dict[kname], atol=2e-2, rtol=2e-2), kname

    print("KERNEL_OK")
</pallas_src>

<mosaic_0001>
module attributes {stable_mosaic.version = 11 : i64} {
  func.func @transformer_kernel(%arg0: i32, %arg1: i32, %arg2: memref<8x32xf32, #tpu.memory_space<vmem>>, %arg3: memref<1x1x32xf32, #tpu.memory_space<vmem>>, %arg4: memref<1x1x32xf32, #tpu.memory_space<vmem>>, %arg5: memref<1x32x96xbf16, #tpu.memory_space<vmem>>, %arg6: memref<1x1x96xf32, #tpu.memory_space<vmem>>, %arg7: memref<1x32x32xbf16, #tpu.memory_space<vmem>>, %arg8: memref<1x1x32xf32, #tpu.memory_space<vmem>>, %arg9: memref<1x1x32xf32, #tpu.memory_space<vmem>>, %arg10: memref<1x1x32xf32, #tpu.memory_space<vmem>>, %arg11: memref<1x32x128xbf16, #tpu.memory_space<vmem>>, %arg12: memref<1x1x128xf32, #tpu.memory_space<vmem>>, %arg13: memref<1x128x32xbf16, #tpu.memory_space<vmem>>, %arg14: memref<1x1x32xf32, #tpu.memory_space<vmem>>, %arg15: memref<8x32xf32, #tpu.memory_space<vmem>>, %arg16: memref<1x1x1x32xf32, #tpu.memory_space<vmem>>, %arg17: memref<8x32xbf16, #tpu.memory_space<vmem>>) attributes {dimension_semantics = [#tpu.dimension_semantics<parallel>, #tpu.dimension_semantics<arbitrary>], iteration_bounds = array<i64: 2, 2>, scalar_prefetch = 0 : i64, scratch_operands = 1 : i64, tpu.core_type = #tpu.core_type<tc>, window_params = [{transform_indices = @transform_0, window_bounds = array<i64: 8, 32>}, {transform_indices = @transform_1, window_bounds = array<i64: 1, 1, 32>}, {transform_indices = @transform_2, window_bounds = array<i64: 1, 1, 32>}, {transform_indices = @transform_3, window_bounds = array<i64: 1, 32, 96>}, {transform_indices = @transform_4, window_bounds = array<i64: 1, 1, 96>}, {transform_indices = @transform_5, window_bounds = array<i64: 1, 32, 32>}, {transform_indices = @transform_6, window_bounds = array<i64: 1, 1, 32>}, {transform_indices = @transform_7, window_bounds = array<i64: 1, 1, 32>}, {transform_indices = @transform_8, window_bounds = array<i64: 1, 1, 32>}, {transform_indices = @transform_9, window_bounds = array<i64: 1, 32, 128>}, {transform_indices = @transform_10, window_bounds = array<i64: 1, 1, 128>}, {transform_indices = @transform_11, window_bounds = array<i64: 1, 128, 32>}, {transform_indices = @transform_12, window_bounds = array<i64: 1, 1, 32>}, {transform_indices = @transform_13, window_bounds = array<i64: 8, 32>}, {transform_indices = @transform_14, window_bounds = array<i64: 1, 1, 1, 32>}]} {
    %c0_i32 = arith.constant 0 : i32
    %0 = arith.cmpi eq, %arg1, %c0_i32 : i32
    %1 = arith.extui %0 : i1 to i32
    %c0_i32_0 = arith.constant 0 : i32
    %2 = arith.cmpi ne, %1, %c0_i32_0 : i32
    scf.if %2 {
      %c0_83 = arith.constant 0 : index
      %c0_84 = arith.constant 0 : index
      %186 = vector.load %arg2[%c0_83, %c0_84] : memref<8x32xf32, #tpu.memory_space<vmem>>, vector<8x32xf32>
      %c0_85 = arith.constant 0 : index
      %c0_86 = arith.constant 0 : index
      %187 = vector.load %arg15[%c0_85, %c0_86] : memref<8x32xf32, #tpu.memory_space<vmem>>, vector<8x32xf32>
      tpu.vector_store %arg15[%c0_85, %c0_86], %186 {strides = array<i32>} : memref<8x32xf32, #tpu.memory_space<vmem>>, vector<8x32xf32>,
    } else {
    }
    %c0 = arith.constant 0 : index
    %c0_1 = arith.constant 0 : index
    %3 = vector.load %arg15[%c0, %c0_1] : memref<8x32xf32, #tpu.memory_space<vmem>>, vector<8x32xf32>
    %c0_2 = arith.constant 0 : index
    %c0_3 = arith.constant 0 : index
    %c0_4 = arith.constant 0 : index
    %4 = vector.load %arg3[%c0_2, %c0_3, %c0_4] : memref<1x1x32xf32, #tpu.memory_space<vmem>>, vector<1x1x32xf32>
    %5 = vector.shape_cast %4 : vector<1x1x32xf32> to vector<32xf32>
    %c0_5 = arith.constant 0 : index
    %c0_6 = arith.constant 0 : index
    %c0_7 = arith.constant 0 : index
    %6 = vector.load %arg4[%c0_5, %c0_6, %c0_7] : memref<1x1x32xf32, #tpu.memory_space<vmem>>, vector<1x1x32xf32>
    %7 = vector.shape_cast %6 : vector<1x1x32xf32> to vector<32xf32>
    %cst = arith.constant dense<0.000000e+00> : vector<8xf32>
    %8 = vector.multi_reduction <add>, %3, %cst [1] : vector<8x32xf32> to vector<8xf32>
    %9 = vector.shape_cast %8 : vector<8xf32> to vector<8x1xf32>
    %cst_8 = arith.constant 3.200000e+01 : f32
    %10 = vector.broadcast %cst_8 : f32 to vector<8x1xf32>
    %11 = arith.divf %9, %10 : vector<8x1xf32>
    %12 = vector.broadcast %11 : vector<8x1xf32> to vector<8x32xf32>
    %13 = arith.subf %3, %12 : vector<8x32xf32>
    %14 = arith.mulf %13, %13 : vector<8x32xf32>
    %cst_9 = arith.constant dense<0.000000e+00> : vector<8xf32>
    %15 = vector.multi_reduction <add>, %14, %cst_9 [1] : vector<8x32xf32> to vector<8xf32>
    %16 = vector.shape_cast %15 : vector<8xf32> to vector<8x1xf32>
    %cst_10 = arith.constant 3.200000e+01 : f32
    %17 = vector.broadcast %cst_10 : f32 to vector<8x1xf32>
    %18 = arith.divf %16, %17 : vector<8x1xf32>
    %19 = vector.broadcast %11 : vector<8x1xf32> to vector<8x32xf32>
    %20 = arith.subf %3, %19 : vector<8x32xf32>
    %cst_11 = arith.constant 9.99999974E-6 : f32
    %21 = vector.broadcast %cst_11 : f32 to vector<8x1xf32>
    %22 = arith.addf %18, %21 : vector<8x1xf32>
    %23 = math.rsqrt %22 : vector<8x1xf32>
    %24 = vector.broadcast %23 : vector<8x1xf32> to vector<8x32xf32>
    %25 = arith.mulf %20, %24 : vector<8x32xf32>
    %26 = vector.shape_cast %5 : vector<32xf32> to vector<1x32xf32>
    %27 = vector.broadcast %26 : vector<1x32xf32> to vector<8x32xf32>
    %28 = arith.mulf %25, %27 : vector<8x32xf32>
    %29 = vector.shape_cast %7 : vector<32xf32> to vector<1x32xf32>
    %30 = vector.broadcast %29 : vector<1x32xf32> to vector<8x32xf32>
    %31 = arith.addf %28, %30 : vector<8x32xf32>
    %32 = arith.truncf %31 : vector<8x32xf32> to vector<8x32xbf16>
    %c0_12 = arith.constant 0 : index
    %c0_13 = arith.constant 0 : index
    %c0_14 = arith.constant 0 : index
    %33 = vector.load %arg5[%c0_12, %c0_13, %c0_14] : memref<1x32x96xbf16, #tpu.memory_space<vmem>>, vector<1x32x96xbf16>
    %34 = vector.shape_cast %33 : vector<1x32x96xbf16> to vector<32x96xbf16>
    %cst_15 = arith.constant dense<0.000000e+00> : vector<8x96xf32>
    %35 = tpu.matmul %32, %34, %cst_15 {dimension_numbers = #tpu.dot_dimension_numbers<[1], [0], [0], [1], [0, 0, 1, 1], [], []>} : vector<8x32xbf16>, vector<32x96xbf16>, vector<8x96xf32> -> vector<8x96xf32>
    %c0_16 = arith.constant 0 : index
    %c0_17 = arith.constant 0 : index
    %c0_18 = arith.constant 0 : index
    %36 = vector.load %arg6[%c0_16, %c0_17, %c0_18] : memref<1x1x96xf32, #tpu.memory_space<vmem>>, vector<1x1x96xf32>
    %37 = vector.shape_cast %36 : vector<1x1x96xf32> to vector<96xf32>
    %38 = vector.shape_cast %37 : vector<96xf32> to vector<1x96xf32>
    %39 = vector.broadcast %38 : vector<1x96xf32> to vector<8x96xf32>
    %40 = arith.addf %35, %39 : vector<8x96xf32>
    %41 = arith.truncf %40 : vector<8x96xf32> to vector<8x96xbf16>
    %42 = vector.extract_strided_slice %41 {offsets = [0, 0], sizes = [8, 8], strides = [1, 1]} : vector<8x96xbf16> to vector<8x8xbf16>
    %43 = vector.extract_strided_slice %41 {offsets = [0, 32], sizes = [8, 8], strides = [1, 1]} : vector<8x96xbf16> to vector<8x8xbf16>
    %44 = vector.extract_strided_slice %41 {offsets = [0, 64], sizes = [8, 8], strides = [1, 1]} : vector<8x96xbf16> to vector<8x8xbf16>
    %cst_19 = arith.constant dense<0.000000e+00> : vector<8x8xf32>
    %45 = tpu.matmul %42, %43, %cst_19 {dimension_numbers = #tpu.dot_dimension_numbers<[1], [1], [0], [0], [0, 0, 1, 0], [], []>} : vector<8x8xbf16>, vector<8x8xbf16>, vector<8x8xf32> -> vector<8x8xf32>
    %cst_20 = arith.constant dense<0xFF800000> : vector<8xf32>
    %46 = vector.multi_reduction <maximumf>, %45, %cst_20 [1] : vector<8x8xf32> to vector<8xf32>
    %47 = vector.shape_cast %46 : vector<8xf32> to vector<8x1xf32>
    %48 = vector.broadcast %47 : vector<8x1xf32> to vector<8x8xf32>
    %49 = arith.subf %45, %48 : vector<8x8xf32>
    %50 = math.exp %49 : vector<8x8xf32>
    %cst_21 = arith.constant dense<0.000000e+00> : vector<8xf32>
    %51 = vector.multi_reduction <add>, %50, %cst_21 [1] : vector<8x8xf32> to vector<8xf32>
    %52 = vector.shape_cast %51 : vector<8xf32> to vector<8x1xf32>
    %53 = tpu.reciprocal %52 {approx = true} : vector<8x1xf32> -> vector<8x1xf32>
    %54 = vector.broadcast %53 : vector<8x1xf32> to vector<8x8xf32>
    %55 = arith.mulf %50, %54 : vector<8x8xf32>
    %56 = arith.truncf %55 : vector<8x8xf32> to vector<8x8xbf16>
    %cst_22 = arith.constant dense<0.000000e+00> : vector<8x8xf32>
    %57 = tpu.matmul %56, %44, %cst_22 {dimension_numbers = #tpu.dot_dimension_numbers<[1], [0], [0], [1], [0, 0, 1, 1], [], []>} : vector<8x8xbf16>, vector<8x8xbf16>, vector<8x8xf32> -> vector<8x8xf32>
    %58 = arith.truncf %57 : vector<8x8xf32> to vector<8x8xbf16>
    %c0_23 = arith.constant 0 : index
    %c0_24 = arith.constant 0 : index
    %59 = vector.load %arg17[%c0_23, %c0_24] : memref<8x32xbf16, #tpu.memory_space<vmem>>, vector<8x8xbf16>
    tpu.vector_store %arg17[%c0_23, %c0_24], %58 {strides = array<i32>} : memref<8x32xbf16, #tpu.memory_space<vmem>>, vector<8x8xbf16>,
    %60 = vector.extract_strided_slice %41 {offsets = [0, 8], sizes = [8, 8], strides = [1, 1]} : vector<8x96xbf16> to vector<8x8xbf16>
    %61 = vector.extract_strided_slice %41 {offsets = [0, 40], sizes = [8, 8], strides = [1, 1]} : vector<8x96xbf16> to vector<8x8xbf16>
    %62 = vector.extract_strided_slice %41 {offsets = [0, 72], sizes = [8, 8], strides = [1, 1]} : vector<8x96xbf16> to vector<8x8xbf16>
    %cst_25 = arith.constant dense<0.000000e+00> : vector<8x8xf32>
    %63 = tpu.matmul %60, %61, %cst_25 {dimension_numbers = #tpu.dot_dimension_numbers<[1], [1], [0], [0], [0, 0, 1, 0], [], []>} : vector<8x8xbf16>, vector<8x8xbf16>, vector<8x8xf32> -> vector<8x8xf32>
    %cst_26 = arith.constant dense<0xFF800000> : vector<8xf32>
    %64 = vector.multi_reduction <maximumf>, %63, %cst_26 [1] : vector<8x8xf32> to vector<8xf32>
    %65 = vector.shape_cast %64 : vector<8xf32> to vector<8x1xf32>
    %66 = vector.broadcast %65 : vector<8x1xf32> to vector<8x8xf32>
    %67 = arith.subf %63, %66 : vector<8x8xf32>
    %68 = math.exp %67 : vector<8x8xf32>
    %cst_27 = arith.constant dense<0.000000e+00> : vector<8xf32>
    %69 = vector.multi_reduction <add>, %68, %cst_27 [1] : vector<8x8xf32> to vector<8xf32>
    %70 = vector.shape_cast %69 : vector<8xf32> to vector<8x1xf32>
    %71 = tpu.reciprocal %70 {approx = true} : vector<8x1xf32> -> vector<8x1xf32>
    %72 = vector.broadcast %71 : vector<8x1xf32> to vector<8x8xf32>
    %73 = arith.mulf %68, %72 : vector<8x8xf32>
    %74 = arith.truncf %73 : vector<8x8xf32> to vector<8x8xbf16>
    %cst_28 = arith.constant dense<0.000000e+00> : vector<8x8xf32>
    %75 = tpu.matmul %74, %62, %cst_28 {dimension_numbers = #tpu.dot_dimension_numbers<[1], [0], [0], [1], [0, 0, 1, 1], [], []>} : vector<8x8xbf16>, vector<8x8xbf16>, vector<8x8xf32> -> vector<8x8xf32>
    %76 = arith.truncf %75 : vector<8x8xf32> to vector<8x8xbf16>
    %c0_29 = arith.constant 0 : index
    %c8 = arith.constant 8 : index
    %77 = vector.load %arg17[%c0_29, %c8] : memref<8x32xbf16, #tpu.memory_space<vmem>>, vector<8x8xbf16>
    tpu.vector_store %arg17[%c0_29, %c8], %76 {strides = array<i32>} : memref<8x32xbf16, #tpu.memory_space<vmem>>, vector<8x8xbf16>,
    %78 = vector.extract_strided_slice %41 {offsets = [0, 16], sizes = [8, 8], strides = [1, 1]} : vector<8x96xbf16> to vector<8x8xbf16>
    %79 = vector.extract_strided_slice %41 {offsets = [0, 48], sizes = [8, 8], strides = [1, 1]} : vector<8x96xbf16> to vector<8x8xbf16>
    %80 = vector.extract_strided_slice %41 {offsets = [0, 80], sizes = [8, 8], strides = [1, 1]} : vector<8x96xbf16> to vector<8x8xbf16>
    %cst_30 = arith.constant dense<0.000000e+00> : vector<8x8xf32>
    %81 = tpu.matmul %78, %79, %cst_30 {dimension_numbers = #tpu.dot_dimension_numbers<[1], [1], [0], [0], [0, 0, 1, 0], [], []>} : vector<8x8xbf16>, vector<8x8xbf16>, vector<8x8xf32> -> vector<8x8xf32>
    %cst_31 = arith.constant dense<0xFF800000> : vector<8xf32>
    %82 = vector.multi_reduction <maximumf>, %81, %cst_31 [1] : vector<8x8xf32> to vector<8xf32>
    %83 = vector.shape_cast %82 : vector<8xf32> to vector<8x1xf32>
    %84 = vector.broadcast %83 : vector<8x1xf32> to vector<8x8xf32>
    %85 = arith.subf %81, %84 : vector<8x8xf32>
    %86 = math.exp %85 : vector<8x8xf32>
    %cst_32 = arith.constant dense<0.000000e+00> : vector<8xf32>
    %87 = vector.multi_reduction <add>, %86, %cst_32 [1] : vector<8x8xf32> to vector<8xf32>
    %88 = vector.shape_cast %87 : vector<8xf32> to vector<8x1xf32>
    %89 = tpu.reciprocal %88 {approx = true} : vector<8x1xf32> -> vector<8x1xf32>
    %90 = vector.broadcast %89 : vector<8x1xf32> to vector<8x8xf32>
    %91 = arith.mulf %86, %90 : vector<8x8xf32>
    %92 = arith.truncf %91 : vector<8x8xf32> to vector<8x8xbf16>
    %cst_33 = arith.constant dense<0.000000e+00> : vector<8x8xf32>
    %93 = tpu.matmul %92, %80, %cst_33 {dimension_numbers = #tpu.dot_dimension_numbers<[1], [0], [0], [1], [0, 0, 1, 1], [], []>} : vector<8x8xbf16>, vector<8x8xbf16>, vector<8x8xf32> -> vector<8x8xf32>
    %94 = arith.truncf %93 : vector<8x8xf32> to vector<8x8xbf16>
    %c0_34 = arith.constant 0 : index
    %c16 = arith.constant 16 : index
    %95 = vector.load %arg17[%c0_34, %c16] : memref<8x32xbf16, #tpu.memory_space<vmem>>, vector<8x8xbf16>
    tpu.vector_store %arg17[%c0_34, %c16], %94 {strides = array<i32>} : memref<8x32xbf16, #tpu.memory_space<vmem>>, vector<8x8xbf16>,
    %96 = vector.extract_strided_slice %41 {offsets = [0, 24], sizes = [8, 8], strides = [1, 1]} : vector<8x96xbf16> to vector<8x8xbf16>
    %97 = vector.extract_strided_slice %41 {offsets = [0, 56], sizes = [8, 8], strides = [1, 1]} : vector<8x96xbf16> to vector<8x8xbf16>
    %98 = vector.extract_strided_slice %41 {offsets = [0, 88], sizes = [8, 8], strides = [1, 1]} : vector<8x96xbf16> to vector<8x8xbf16>
    %cst_35 = arith.constant dense<0.000000e+00> : vector<8x8xf32>
    %99 = tpu.matmul %96, %97, %cst_35 {dimension_numbers = #tpu.dot_dimension_numbers<[1], [1], [0], [0], [0, 0, 1, 0], [], []>} : vector<8x8xbf16>, vector<8x8xbf16>, vector<8x8xf32> -> vector<8x8xf32>
    %cst_36 = arith.constant dense<0xFF800000> : vector<8xf32>
    %100 = vector.multi_reduction <maximumf>, %99, %cst_36 [1] : vector<8x8xf32> to vector<8xf32>
    %101 = vector.shape_cast %100 : vector<8xf32> to vector<8x1xf32>
    %102 = vector.broadcast %101 : vector<8x1xf32> to vector<8x8xf32>
    %103 = arith.subf %99, %102 : vector<8x8xf32>
    %104 = math.exp %103 : vector<8x8xf32>
    %cst_37 = arith.constant dense<0.000000e+00> : vector<8xf32>
    %105 = vector.multi_reduction <add>, %104, %cst_37 [1] : vector<8x8xf32> to vector<8xf32>
    %106 = vector.shape_cast %105 : vector<8xf32> to vector<8x1xf32>
    %107 = tpu.reciprocal %106 {approx = true} : vector<8x1xf32> -> vector<8x1xf32>
    %108 = vector.broadcast %107 : vector<8x1xf32> to vector<8x8xf32>
    %109 = arith.mulf %104, %108 : vector<8x8xf32>
    %110 = arith.truncf %109 : vector<8x8xf32> to vector<8x8xbf16>
    %cst_38 = arith.constant dense<0.000000e+00> : vector<8x8xf32>
    %111 = tpu.matmul %110, %98, %cst_38 {dimension_numbers = #tpu.dot_dimension_numbers<[1], [0], [0], [1], [0, 0, 1, 1], [], []>} : vector<8x8xbf16>, vector<8x8xbf16>, vector<8x8xf32> -> vector<8x8xf32>
    %112 = arith.truncf %111 : vector<8x8xf32> to vector<8x8xbf16>
    %c0_39 = arith.constant 0 : index
    %c24 = arith.constant 24 : index
    %113 = vector.load %arg17[%c0_39, %c24] : memref<8x32xbf16, #tpu.memory_space<vmem>>, vector<8x8xbf16>
    tpu.vector_store %arg17[%c0_39, %c24], %112 {strides = array<i32>} : memref<8x32xbf16, #tpu.memory_space<vmem>>, vector<8x8xbf16>,
    %c0_40 = arith.constant 0 : index
    %c0_41 = arith.constant 0 : index
    %114 = vector.load %arg17[%c0_40, %c0_41] : memref<8x32xbf16, #tpu.memory_space<vmem>>, vector<8x32xbf16>
    %c0_42 = arith.constant 0 : index
    %c0_43 = arith.constant 0 : index
    %c0_44 = arith.constant 0 : index
    %115 = vector.load %arg7[%c0_42, %c0_43, %c0_44] : memref<1x32x32xbf16, #tpu.memory_space<vmem>>, vector<1x32x32xbf16>
    %116 = vector.shape_cast %115 : vector<1x32x32xbf16> to vector<32x32xbf16>
    %cst_45 = arith.constant dense<0.000000e+00> : vector<8x32xf32>
    %117 = tpu.matmul %114, %116, %cst_45 {dimension_numbers = #tpu.dot_dimension_numbers<[1], [0], [0], [1], [0, 0, 1, 1], [], []>} : vector<8x32xbf16>, vector<32x32xbf16>, vector<8x32xf32> -> vector<8x32xf32>
    %c0_46 = arith.constant 0 : index
    %c0_47 = arith.constant 0 : index
    %c0_48 = arith.constant 0 : index
    %118 = vector.load %arg8[%c0_46, %c0_47, %c0_48] : memref<1x1x32xf32, #tpu.memory_space<vmem>>, vector<1x1x32xf32>
    %119 = vector.shape_cast %118 : vector<1x1x32xf32> to vector<32xf32>
    %120 = vector.shape_cast %119 : vector<32xf32> to vector<1x32xf32>
    %121 = vector.broadcast %120 : vector<1x32xf32> to vector<8x32xf32>
    %122 = arith.addf %117, %121 : vector<8x32xf32>
    %123 = arith.addf %3, %122 : vector<8x32xf32>
    %c0_49 = arith.constant 0 : index
    %c0_50 = arith.constant 0 : index
    %c0_51 = arith.constant 0 : index
    %124 = vector.load %arg9[%c0_49, %c0_50, %c0_51] : memref<1x1x32xf32, #tpu.memory_space<vmem>>, vector<1x1x32xf32>
    %125 = vector.shape_cast %124 : vector<1x1x32xf32> to vector<32xf32>
    %c0_52 = arith.constant 0 : index
    %c0_53 = arith.constant 0 : index
    %c0_54 = arith.constant 0 : index
    %126 = vector.load %arg10[%c0_52, %c0_53, %c0_54] : memref<1x1x32xf32, #tpu.memory_space<vmem>>, vector<1x1x32xf32>
    %127 = vector.shape_cast %126 : vector<1x1x32xf32> to vector<32xf32>
    %cst_55 = arith.constant dense<0.000000e+00> : vector<8xf32>
    %128 = vector.multi_reduction <add>, %123, %cst_55 [1] : vector<8x32xf32> to vector<8xf32>
    %129 = vector.shape_cast %128 : vector<8xf32> to vector<8x1xf32>
    %cst_56 = arith.constant 3.200000e+01 : f32
    %130 = vector.broadcast %cst_56 : f32 to vector<8x1xf32>
    %131 = arith.divf %129, %130 : vector<8x1xf32>
    %132 = vector.broadcast %131 : vector<8x1xf32> to vector<8x32xf32>
    %133 = arith.subf %123, %132 : vector<8x32xf32>
    %134 = arith.mulf %133, %133 : vector<8x32xf32>
    %cst_57 = arith.constant dense<0.000000e+00> : vector<8xf32>
    %135 = vector.multi_reduction <add>, %134, %cst_57 [1] : vector<8x32xf32> to vector<8xf32>
    %136 = vector.shape_cast %135 : vector<8xf32> to vector<8x1xf32>
    %cst_58 = arith.constant 3.200000e+01 : f32
    %137 = vector.broadcast %cst_58 : f32 to vector<8x1xf32>
    %138 = arith.divf %136, %137 : vector<8x1xf32>
    %139 = vector.broadcast %131 : vector<8x1xf32> to vector<8x32xf32>
    %140 = arith.subf %123, %139 : vector<8x32xf32>
    %cst_59 = arith.constant 9.99999974E-6 : f32
    %141 = vector.broadcast %cst_59 : f32 to vector<8x1xf32>
    %142 = arith.addf %138, %141 : vector<8x1xf32>
    %143 = math.rsqrt %142 : vector<8x1xf32>
    %144 = vector.broadcast %143 : vector<8x1xf32> to vector<8x32xf32>
    %145 = arith.mulf %140, %144 : vector<8x32xf32>
    %146 = vector.shape_cast %125 : vector<32xf32> to vector<1x32xf32>
    %147 = vector.broadcast %146 : vector<1x32xf32> to vector<8x32xf32>
    %148 = arith.mulf %145, %147 : vector<8x32xf32>
    %149 = vector.shape_cast %127 : vector<32xf32> to vector<1x32xf32>
    %150 = vector.broadcast %149 : vector<1x32xf32> to vector<8x32xf32>
    %151 = arith.addf %148, %150 : vector<8x32xf32>
    %152 = arith.truncf %151 : vector<8x32xf32> to vector<8x32xbf16>
    %c0_60 = arith.constant 0 : index
    %c0_61 = arith.constant 0 : index
    %c0_62 = arith.constant 0 : index
    %153 = vector.load %arg12[%c0_60, %c0_61, %c0_62] : memref<1x1x128xf32, #tpu.memory_space<vmem>>, vector<1x1x128xf32>
    %154 = vector.shape_cast %153 : vector<1x1x128xf32> to vector<128xf32>
    %cst_63 = arith.constant 0.000000e+00 : f32
    %155 = vector.broadcast %cst_63 : f32 to vector<8x32xf32>
    %c0_64 = arith.constant 0 : index
    %c0_65 = arith.constant 0 : index
    %c0_66 = arith.constant 0 : index
    %156 = vector.load %arg11[%c0_64, %c0_65, %c0_66] : memref<1x32x128xbf16, #tpu.memory_space<vmem>>, vector<1x32x128xbf16>
    %157 = vector.shape_cast %156 : vector<1x32x128xbf16> to vector<32x128xbf16>
    %cst_67 = arith.constant dense<0.000000e+00> : vector<8x128xf32>
    %158 = tpu.matmul %152, %157, %cst_67 {dimension_numbers = #tpu.dot_dimension_numbers<[1], [0], [0], [1], [0, 0, 1, 1], [], []>} : vector<8x32xbf16>, vector<32x128xbf16>, vector<8x128xf32> -> vector<8x128xf32>
    %159 = vector.shape_cast %154 : vector<128xf32> to vector<1x128xf32>
    %160 = vector.broadcast %159 : vector<1x128xf32> to vector<8x128xf32>
    %161 = arith.addf %158, %160 : vector<8x128xf32>
    %cst_68 = arith.constant 1.702000e+00 : f32
    %162 = vector.broadcast %cst_68 : f32 to vector<8x128xf32>
    %163 = arith.mulf %162, %161 : vector<8x128xf32>
    %164 = arith.negf %163 : vector<8x128xf32>
    %165 = math.exp %164 : vector<8x128xf32>
    %cst_69 = arith.constant 1.000000e+00 : f32
    %166 = vector.broadcast %cst_69 : f32 to vector<8x128xf32>
    %167 = arith.addf %166, %165 : vector<8x128xf32>
    %168 = arith.divf %166, %167 : vector<8x128xf32>
    %169 = arith.mulf %161, %168 : vector<8x128xf32>
    %170 = arith.truncf %169 : vector<8x128xf32> to vector<8x128xbf16>
    %c0_70 = arith.constant 0 : index
    %c0_71 = arith.constant 0 : index
    %c0_72 = arith.constant 0 : index
    %171 = vector.load %arg13[%c0_70, %c0_71, %c0_72] : memref<1x128x32xbf16, #tpu.memory_space<vmem>>, vector<1x128x32xbf16>
    %172 = vector.shape_cast %171 : vector<1x128x32xbf16> to vector<128x32xbf16>
    %cst_73 = arith.constant dense<0.000000e+00> : vector<8x32xf32>
    %173 = tpu.matmul %170, %172, %cst_73 {dimension_numbers = #tpu.dot_dimension_numbers<[1], [0], [0], [1], [0, 0, 1, 1], [], []>} : vector<8x128xbf16>, vector<128x32xbf16>, vector<8x32xf32> -> vector<8x32xf32>
    %174 = arith.addf %155, %173 : vector<8x32xf32>
    %175 = arith.addf %123, %174 : vector<8x32xf32>
    %c0_74 = arith.constant 0 : index
    %c0_75 = arith.constant 0 : index
    %c0_76 = arith.constant 0 : index
    %176 = vector.load %arg14[%c0_74, %c0_75, %c0_76] : memref<1x1x32xf32, #tpu.memory_space<vmem>>, vector<1x1x32xf32>
    %177 = vector.shape_cast %176 : vector<1x1x32xf32> to vector<32xf32>
    %178 = vector.shape_cast %177 : vector<32xf32> to vector<1x32xf32>
    %179 = vector.broadcast %178 : vector<1x32xf32> to vector<8x32xf32>
    %180 = arith.addf %175, %179 : vector<8x32xf32>
    %c0_77 = arith.constant 0 : index
    %c0_78 = arith.constant 0 : index
    %181 = vector.load %arg15[%c0_77, %c0_78] : memref<8x32xf32, #tpu.memory_space<vmem>>, vector<8x32xf32>
    tpu.vector_store %arg15[%c0_77, %c0_78], %180 {strides = array<i32>} : memref<8x32xf32, #tpu.memory_space<vmem>>, vector<8x32xf32>,
    %182 = vector.extract_strided_slice %180 {offsets = [0, 0], sizes = [1, 32], strides = [1, 1]} : vector<8x32xf32> to vector<1x32xf32>
    %c0_79 = arith.constant 0 : index
    %c0_80 = arith.constant 0 : index
    %c0_81 = arith.constant 0 : index
    %c0_82 = arith.constant 0 : index
    %183 = vector.load %arg16[%c0_79, %c0_80, %c0_81, %c0_82] : memref<1x1x1x32xf32, #tpu.memory_space<vmem>>, vector<1x1x1x32xf32>
    %184 = vector.shape_cast %183 : vector<1x1x1x32xf32> to vector<1x32xf32>
    %185 = vector.shape_cast %182 : vector<1x32xf32> to vector<1x1x1x32xf32>
    tpu.vector_store %arg16[%c0_79, %c0_80, %c0_81, %c0_82], %185 {strides = array<i32>} : memref<1x1x1x32xf32, #tpu.memory_space<vmem>>, vector<1x1x1x32xf32>,
    return
  }
  func.func @transform_0(%arg0: i32, %arg1: i32) -> (i32, i32) {
    %c0_i32 = arith.constant 0 : i32
    %c0_i32_0 = arith.constant 0 : i32
    return %arg0, %c0_i32 : i32, i32
  }
  func.func @transform_1(%arg0: i32, %arg1: i32) -> (i32, i32, i32) {
    %c0_i32 = arith.constant 0 : i32
    %c0_i32_0 = arith.constant 0 : i32
    %c0_i32_1 = arith.constant 0 : i32
    return %arg1, %c0_i32, %c0_i32_0 : i32, i32, i32
  }
  func.func @transform_2(%arg0: i32, %arg1: i32) -> (i32, i32, i32) {
    %c0_i32 = arith.constant 0 : i32
    %c0_i32_0 = arith.constant 0 : i32
    %c0_i32_1 = arith.constant 0 : i32
    return %arg1, %c0_i32, %c0_i32_0 : i32, i32, i32
  }
  func.func @transform_3(%arg0: i32, %arg1: i32) -> (i32, i32, i32) {
    %c0_i32 = arith.constant 0 : i32
    %c0_i32_0 = arith.constant 0 : i32
    %c0_i32_1 = arith.constant 0 : i32
    return %arg1, %c0_i32, %c0_i32_0 : i32, i32, i32
  }
  func.func @transform_4(%arg0: i32, %arg1: i32) -> (i32, i32, i32) {
    %c0_i32 = arith.constant 0 : i32
    %c0_i32_0 = arith.constant 0 : i32
    %c0_i32_1 = arith.constant 0 : i32
    return %arg1, %c0_i32, %c0_i32_0 : i32, i32, i32
  }
  func.func @transform_5(%arg0: i32, %arg1: i32) -> (i32, i32, i32) {
    %c0_i32 = arith.constant 0 : i32
    %c0_i32_0 = arith.constant 0 : i32
    %c0_i32_1 = arith.constant 0 : i32
    return %arg1, %c0_i32, %c0_i32_0 : i32, i32, i32
  }
  func.func @transform_6(%arg0: i32, %arg1: i32) -> (i32, i32, i32) {
    %c0_i32 = arith.constant 0 : i32
    %c0_i32_0 = arith.constant 0 : i32
    %c0_i32_1 = arith.constant 0 : i32
    return %arg1, %c0_i32, %c0_i32_0 : i32, i32, i32
  }
  func.func @transform_7(%arg0: i32, %arg1: i32) -> (i32, i32, i32) {
    %c0_i32 = arith.constant 0 : i32
    %c0_i32_0 = arith.constant 0 : i32
    %c0_i32_1 = arith.constant 0 : i32
    return %arg1, %c0_i32, %c0_i32_0 : i32, i32, i32
  }
  func.func @transform_8(%arg0: i32, %arg1: i32) -> (i32, i32, i32) {
    %c0_i32 = arith.constant 0 : i32
    %c0_i32_0 = arith.constant 0 : i32
    %c0_i32_1 = arith.constant 0 : i32
    return %arg1, %c0_i32, %c0_i32_0 : i32, i32, i32
  }
  func.func @transform_9(%arg0: i32, %arg1: i32) -> (i32, i32, i32) {
    %c0_i32 = arith.constant 0 : i32
    %c0_i32_0 = arith.constant 0 : i32
    %c0_i32_1 = arith.constant 0 : i32
    return %arg1, %c0_i32, %c0_i32_0 : i32, i32, i32
  }
  func.func @transform_10(%arg0: i32, %arg1: i32) -> (i32, i32, i32) {
    %c0_i32 = arith.constant 0 : i32
    %c0_i32_0 = arith.constant 0 : i32
    %c0_i32_1 = arith.constant 0 : i32
    return %arg1, %c0_i32, %c0_i32_0 : i32, i32, i32
  }
  func.func @transform_11(%arg0: i32, %arg1: i32) -> (i32, i32, i32) {
    %c0_i32 = arith.constant 0 : i32
    %c0_i32_0 = arith.constant 0 : i32
    %c0_i32_1 = arith.constant 0 : i32
    return %arg1, %c0_i32, %c0_i32_0 : i32, i32, i32
  }
  func.func @transform_12(%arg0: i32, %arg1: i32) -> (i32, i32, i32) {
    %c0_i32 = arith.constant 0 : i32
    %c0_i32_0 = arith.constant 0 : i32
    %c0_i32_1 = arith.constant 0 : i32
    return %arg1, %c0_i32, %c0_i32_0 : i32, i32, i32
  }
  func.func @transform_13(%arg0: i32, %arg1: i32) -> (i32, i32) {
    %c0_i32 = arith.constant 0 : i32
    %c0_i32_0 = arith.constant 0 : i32
    return %arg0, %c0_i32 : i32, i32
  }
  func.func @transform_14(%arg0: i32, %arg1: i32) -> (i32, i32, i32, i32) {
    %c0_i32 = arith.constant 0 : i32
    %c0_i32_0 = arith.constant 0 : i32
    %c0_i32_1 = arith.constant 0 : i32
    return %arg1, %arg0, %c0_i32, %c0_i32_0 : i32, i32, i32, i32
  }
}

</mosaic_0001>

<llo_original>
// kernel: tpu_custom_call.1
$region0: #{tpu_custom_call.1}
  #allocation0 [shape = 'u32[]', space=smem, size = 0x4, offset = 0x4, fixed_abs, tag = 'smem constant byte address 0x4 - core index']
  #allocation1 [shape = 'u32[144,128]{1,0:T(1,128)}', space=vmem, size = 0x12000, scoped, tag = 'internal scratch']
  #allocation2 [shape = 'bf16[8,32]{1,0:T(8,128)(2,1)}', space=vmem, size = 0x800, scoped, tag = 'scratch operand']
  %s0 = inlined_call_operand.vmem [shape: f32[16,32], index: 0, kind: input, shape index: {}]
  %s1 = inlined_call_operand.vmem [shape: f32[2,1,32], index: 1, kind: input, shape index: {}]
  %s2 = inlined_call_operand.vmem [shape: f32[2,1,32], index: 2, kind: input, shape index: {}]
  %s3 = inlined_call_operand.vmem [shape: bf16[2,32,96], index: 3, kind: input, shape index: {}]
  %s4 = inlined_call_operand.vmem [shape: f32[2,1,96], index: 4, kind: input, shape index: {}]
  %s5 = inlined_call_operand.vmem [shape: bf16[2,32,32], index: 5, kind: input, shape index: {}]
  %s6 = inlined_call_operand.vmem [shape: f32[2,1,32], index: 6, kind: input, shape index: {}]
  %s7 = inlined_call_operand.vmem [shape: f32[2,1,32], index: 7, kind: input, shape index: {}]
  %s8 = inlined_call_operand.vmem [shape: f32[2,1,32], index: 8, kind: input, shape index: {}]
  %s9 = inlined_call_operand.vmem [shape: bf16[2,32,128], index: 9, kind: input, shape index: {}]
  %s10 = inlined_call_operand.vmem [shape: f32[2,1,128], index: 10, kind: input, shape index: {}]
  %s11 = inlined_call_operand.vmem [shape: bf16[2,128,32], index: 11, kind: input, shape index: {}]
  %s12 = inlined_call_operand.vmem [shape: f32[2,1,32], index: 12, kind: input, shape index: {}]
  %s13 = inlined_call_operand.hbm [shape: f32[16,32], index: 13, kind: output, shape index: {0}]
  %s14 = inlined_call_operand.hbm [shape: f32[2,2,1,32], index: 14, kind: output, shape index: {1}]
  %15 = xla_tuple %s13, %s14
  %s16 = sld [smem:[#allocation0]]
  $region97: #{tpu_custom_call.1} parent=0
    _
  %s18 = ssub.s32 1, %s16
  %s19 = scalar_select 0, %s18, %s16
  $region1: #{tpu_custom_call.1} parent=0
    #allocation3 [shape = 'u8[8192]{0}', space=vmem, size = 0x2000, scoped, tag = 'output window, operand 0']
    #allocation4 [shape = 's32[2]{0}', space=sflag, size = 0x8, scoped, tag = 'scoped memory for tpu_custom_call.1']
    #allocation5 [shape = 'u8[1024]{0}', space=vmem, size = 0x400, scoped, tag = 'output window, operand 1']
    #allocation6 [shape = 's32[2]{0}', space=sflag, size = 0x8, scoped, tag = 'scoped memory for tpu_custom_call.1']
    %20 = vsyncpa [#allocation4], 0
    %s21 = scalar_lea.sflag [#allocation4], 1
    %22 = vsyncpa %s21, 0
    %23 = vsyncpa [#allocation6], 0
    %s24 = scalar_lea.sflag [#allocation6], 1
    %25 = vsyncpa %s24, 0
    loop: start=0, step=1, limit=6
    $region2: #{tpu_custom_call.1} parent=1 // loop_pre_header
      _
    $region3: #{tpu_custom_call.1} parent=1 // loop_header
      %s27 = sphi 0, %s31
      %p28 = scmp.ge.s32.totalorder %s27, 6
      %s34 = sphi 0, %s46
      %s35 = sphi 0, %s42
      %s36 = sphi 0, %s34
      %s37 = sphi 0, %s35
      %s38 = sphi 0, %s36
      %s39 = sphi 0, %s37
      %s49 = sphi 0, %s51
      %s52 = sphi 0, %s49
      %s53 = sphi 0, %s52
      %s69 = sphi 0, %s53
      %s75 = sphi 0, %s77
      %s78 = sphi 0, %s75
      %s79 = sphi 0, %s78
      %s95 = sphi 0, %s79
      %s101 = sphi 0, %s103
      %s104 = sphi 0, %s101
      %s105 = sphi 0, %s104
      %s121 = sphi 0, %s105
      %s127 = sphi 0, %s129
      %s130 = sphi 0, %s127
      %s131 = sphi 0, %s130
      %s147 = sphi 0, %s131
      %s153 = sphi 0, %s155
      %s156 = sphi 0, %s153
      %s157 = sphi 0, %s156
      %s173 = sphi 0, %s157
      %s179 = sphi 0, %s181
      %s182 = sphi 0, %s179
      %s183 = sphi 0, %s182
      %s199 = sphi 0, %s183
      %s205 = sphi 0, %s207
      %s208 = sphi 0, %s205
      %s209 = sphi 0, %s208
      %s225 = sphi 0, %s209
      %s231 = sphi 0, %s233
      %s234 = sphi 0, %s231
      %s235 = sphi 0, %s234
      %s251 = sphi 0, %s235
      %s257 = sphi 0, %s259
      %s260 = sphi 0, %s257
      %s261 = sphi 0, %s260
      %s277 = sphi 0, %s261
      %s283 = sphi 0, %s285
      %s286 = sphi 0, %s283
      %s287 = sphi 0, %s286
      %s303 = sphi 0, %s287
      %s309 = sphi 0, %s311
      %s312 = sphi 0, %s309
      %s313 = sphi 0, %s312
      %s329 = sphi 0, %s313
      %s335 = sphi 0, %s337
      %s338 = sphi 0, %s335
      %s339 = sphi 0, %s338
      %s355 = sphi 0, %s339
      %s361 = sphi 0, %s363
      %s364 = sphi 0, %s361
      %s365 = sphi 0, %s364
      %s381 = sphi 0, %s365
      %s387 = sphi 0, %s389
      %s390 = sphi 0, %s387
      %s391 = sphi 0, %s390
      %s407 = sphi 0, %s391
      %s415 = sphi 0, %s417
      %s418 = sphi 0, %s415
      %s419 = sphi 0, %s418
      %s435 = sphi 0, %s419
    $region4: #{tpu_custom_call.1} parent=1 // loop_header_branch
      %30 = sbr.rel (%p28) target = $region8
    $region5: #{tpu_custom_call.1} parent=1 // loop_body
      %s32 = ssub.s32 %s27, 1
      %s33 = ssub.s32 %s27, 2
      %s40 = sadd.s32 1, %s35
      %p41 = scmp.ge.s32.totalorder %s40, 2
      %s42 = scalar_select %p41, 0, %s40
      %s43 = sadd.s32 1, %s34
      %s44 = scalar_select %p41, %s43, %s34
      %p45 = scmp.ge.s32.totalorder %s44, 2
      %s46 = scalar_select %p45, 0, %s44
      %s47 = ssub.s32 %s34, %s46
      %p48 = scmp.eq.s32.totalorder %s47, 0
      %s50 = sadd.s32 %s49, 1
      %s51 = scalar_select %p48, %s49, %s50
      %p54 = pneg %p48
      %p55 = scmp.eq.s32.totalorder %s27, 3
      %p56 = por %p54, %p55
      %p57 = scmp.ne.s32.totalorder %s49, %s52
      %p58 = scmp.eq.s32.totalorder %s27, 0
      %p59 = por %p57, %p58
      %p60 = scmp.ne.s32.totalorder %s49, %s52
      %p61 = scmp.eq.s32.totalorder %s32, 3
      %p62 = por %p60, %p61
      %p63 = scmp.ne.s32.totalorder %s52, %s53
      %p64 = scmp.eq.s32.totalorder %s32, 0
      %p65 = por %p63, %p64
      %p66 = scmp.ne.s32.totalorder %s52, %s53
      %p67 = scmp.eq.s32.totalorder %s33, 3
      %p68 = por %p66, %p67
      %p70 = scmp.ne.s32.totalorder %s53, %s69
      %p71 = scmp.eq.s32.totalorder %s33, 0
      %p72 = por %p70, %p71
      %s73 = ssub.s32 %s35, %s42
      %p74 = scmp.eq.s32.totalorder %s73, 0
      %s76 = sadd.s32 %s75, 1
      %s77 = scalar_select %p74, %s75, %s76
      %p80 = pneg %p74
      %p81 = scmp.eq.s32.totalorder %s27, 3
      %p82 = por %p80, %p81
      %p83 = scmp.ne.s32.totalorder %s75, %s78
      %p84 = scmp.eq.s32.totalorder %s27, 0
      %p85 = por %p83, %p84
      %p86 = scmp.ne.s32.totalorder %s75, %s78
      %p87 = scmp.eq.s32.totalorder %s32, 3
      %p88 = por %p86, %p87
      %p89 = scmp.ne.s32.totalorder %s78, %s79
      %p90 = scmp.eq.s32.totalorder %s32, 0
      %p91 = por %p89, %p90
      %p92 = scmp.ne.s32.totalorder %s78, %s79
      %p93 = scmp.eq.s32.totalorder %s33, 3
      %p94 = por %p92, %p93
      %p96 = scmp.ne.s32.totalorder %s79, %s95
      %p97 = scmp.eq.s32.totalorder %s33, 0
      %p98 = por %p96, %p97
      %s99 = ssub.s32 %s35, %s42
      %p100 = scmp.eq.s32.totalorder %s99, 0
      %s102 = sadd.s32 %s101, 1
      %s103 = scalar_select %p100, %s101, %s102
      %p106 = pneg %p100
      %p107 = scmp.eq.s32.totalorder %s27, 3
      %p108 = por %p106, %p107
      %p109 = scmp.ne.s32.totalorder %s101, %s104
      %p110 = scmp.eq.s32.totalorder %s27, 0
      %p111 = por %p109, %p110
      %p112 = scmp.ne.s32.totalorder %s101, %s104
      %p113 = scmp.eq.s32.totalorder %s32, 3
      %p114 = por %p112, %p113
      %p115 = scmp.ne.s32.totalorder %s104, %s105
      %p116 = scmp.eq.s32.totalorder %s32, 0
      %p117 = por %p115, %p116
      %p118 = scmp.ne.s32.totalorder %s104, %s105
      %p119 = scmp.eq.s32.totalorder %s33, 3
      %p120 = por %p118, %p119
      %p122 = scmp.ne.s32.totalorder %s105, %s121
      %p123 = scmp.eq.s32.totalorder %s33, 0
      %p124 = por %p122, %p123
      %s125 = ssub.s32 %s35, %s42
      %p126 = scmp.eq.s32.totalorder %s125, 0
      %s128 = sadd.s32 %s127, 1
      %s129 = scalar_select %p126, %s127, %s128
      %p132 = pneg %p126
      %p133 = scmp.eq.s32.totalorder %s27, 3
      %p134 = por %p132, %p133
      %p135 = scmp.ne.s32.totalorder %s127, %s130
      %p136 = scmp.eq.s32.totalorder %s27, 0
      %p137 = por %p135, %p136
      %p138 = scmp.ne.s32.totalorder %s127, %s130
      %p139 = scmp.eq.s32.totalorder %s32, 3
      %p140 = por %p138, %p139
      %p141 = scmp.ne.s32.totalorder %s130, %s131
      %p142 = scmp.eq.s32.totalorder %s32, 0
      %p143 = por %p141, %p142
      %p144 = scmp.ne.s32.totalorder %s130, %s131
      %p145 = scmp.eq.s32.totalorder %s33, 3
      %p146 = por %p144, %p145
      %p148 = scmp.ne.s32.totalorder %s131, %s147
      %p149 = scmp.eq.s32.totalorder %s33, 0
      %p150 = por %p148, %p149
      %s151 = ssub.s32 %s35, %s42
      %p152 = scmp.eq.s32.totalorder %s151, 0
      %s154 = sadd.s32 %s153, 1
      %s155 = scalar_select %p152, %s153, %s154
      %p158 = pneg %p152
      %p159 = scmp.eq.s32.totalorder %s27, 3
      %p160 = por %p158, %p159
      %p161 = scmp.ne.s32.totalorder %s153, %s156
      %p162 = scmp.eq.s32.totalorder %s27, 0
      %p163 = por %p161, %p162
      %p164 = scmp.ne.s32.totalorder %s153, %s156
      %p165 = scmp.eq.s32.totalorder %s32, 3
      %p166 = por %p164, %p165
      %p167 = scmp.ne.s32.totalorder %s156, %s157
      %p168 = scmp.eq.s32.totalorder %s32, 0
      %p169 = por %p167, %p168
      %p170 = scmp.ne.s32.totalorder %s156, %s157
      %p171 = scmp.eq.s32.totalorder %s33, 3
      %p172 = por %p170, %p171
      %p174 = scmp.ne.s32.totalorder %s157, %s173
      %p175 = scmp.eq.s32.totalorder %s33, 0
      %p176 = por %p174, %p175
      %s177 = ssub.s32 %s35, %s42
      %p178 = scmp.eq.s32.totalorder %s177, 0
      %s180 = sadd.s32 %s179, 1
      %s181 = scalar_select %p178, %s179, %s180
      %p184 = pneg %p178
      %p185 = scmp.eq.s32.totalorder %s27, 3
      %p186 = por %p184, %p185
      %p187 = scmp.ne.s32.totalorder %s179, %s182
      %p188 = scmp.eq.s32.totalorder %s27, 0
      %p189 = por %p187, %p188
      %p190 = scmp.ne.s32.totalorder %s179, %s182
      %p191 = scmp.eq.s32.totalorder %s32, 3
      %p192 = por %p190, %p191
      %p193 = scmp.ne.s32.totalorder %s182, %s183
      %p194 = scmp.eq.s32.totalorder %s32, 0
      %p195 = por %p193, %p194
      %p196 = scmp.ne.s32.totalorder %s182, %s183
      %p197 = scmp.eq.s32.totalorder %s33, 3
      %p198 = por %p196, %p197
      %p200 = scmp.ne.s32.totalorder %s183, %s199
      %p201 = scmp.eq.s32.totalorder %s33, 0
      %p202 = por %p200, %p201
      %s203 = ssub.s32 %s35, %s42
      %p204 = scmp.eq.s32.totalorder %s203, 0
      %s206 = sadd.s32 %s205, 1
      %s207 = scalar_select %p204, %s205, %s206
      %p210 = pneg %p204
      %p211 = scmp.eq.s32.totalorder %s27, 3
      %p212 = por %p210, %p211
      %p213 = scmp.ne.s32.totalorder %s205, %s208
      %p214 = scmp.eq.s32.totalorder %s27, 0
      %p215 = por %p213, %p214
      %p216 = scmp.ne.s32.totalorder %s205, %s208
      %p217 = scmp.eq.s32.totalorder %s32, 3
      %p218 = por %p216, %p217
      %p219 = scmp.ne.s32.totalorder %s208, %s209
      %p220 = scmp.eq.s32.totalorder %s32, 0
      %p221 = por %p219, %p220
      %p222 = scmp.ne.s32.totalorder %s208, %s209
      %p223 = scmp.eq.s32.totalorder %s33, 3
      %p224 = por %p222, %p223
      %p226 = scmp.ne.s32.totalorder %s209, %s225
      %p227 = scmp.eq.s32.totalorder %s33, 0
      %p228 = por %p226, %p227
      %s229 = ssub.s32 %s35, %s42
      %p230 = scmp.eq.s32.totalorder %s229, 0
      %s232 = sadd.s32 %s231, 1
      %s233 = scalar_select %p230, %s231, %s232
      %p236 = pneg %p230
      %p237 = scmp.eq.s32.totalorder %s27, 3
      %p238 = por %p236, %p237
      %p239 = scmp.ne.s32.totalorder %s231, %s234
      %p240 = scmp.eq.s32.totalorder %s27, 0
      %p241 = por %p239, %p240
      %p242 = scmp.ne.s32.totalorder %s231, %s234
      %p243 = scmp.eq.s32.totalorder %s32, 3
      %p244 = por %p242, %p243
      %p245 = scmp.ne.s32.totalorder %s234, %s235
      %p246 = scmp.eq.s32.totalorder %s32, 0
      %p247 = por %p245, %p246
      %p248 = scmp.ne.s32.totalorder %s234, %s235
      %p249 = scmp.eq.s32.totalorder %s33, 3
      %p250 = por %p248, %p249
      %p252 = scmp.ne.s32.totalorder %s235, %s251
      %p253 = scmp.eq.s32.totalorder %s33, 0
      %p254 = por %p252, %p253
      %s255 = ssub.s32 %s35, %s42
      %p256 = scmp.eq.s32.totalorder %s255, 0
      %s258 = sadd.s32 %s257, 1
      %s259 = scalar_select %p256, %s257, %s258
      %p262 = pneg %p256
      %p263 = scmp.eq.s32.totalorder %s27, 3
      %p264 = por %p262, %p263
      %p265 = scmp.ne.s32.totalorder %s257, %s260
      %p266 = scmp.eq.s32.totalorder %s27, 0
      %p267 = por %p265, %p266
      %p268 = scmp.ne.s32.totalorder %s257, %s260
      %p269 = scmp.eq.s32.totalorder %s32, 3
      %p270 = por %p268, %p269
      %p271 = scmp.ne.s32.totalorder %s260, %s261
      %p272 = scmp.eq.s32.totalorder %s32, 0
      %p273 = por %p271, %p272
      %p274 = scmp.ne.s32.totalorder %s260, %s261
      %p275 = scmp.eq.s32.totalorder %s33, 3
      %p276 = por %p274, %p275
      %p278 = scmp.ne.s32.totalorder %s261, %s277
      %p279 = scmp.eq.s32.totalorder %s33, 0
      %p280 = por %p278, %p279
      %s281 = ssub.s32 %s35, %s42
      %p282 = scmp.eq.s32.totalorder %s281, 0
      %s284 = sadd.s32 %s283, 1
      %s285 = scalar_select %p282, %s283, %s284
      %p288 = pneg %p282
      %p289 = scmp.eq.s32.totalorder %s27, 3
      %p290 = por %p288, %p289
      %p291 = scmp.ne.s32.totalorder %s283, %s286
      %p292 = scmp.eq.s32.totalorder %s27, 0
      %p293 = por %p291, %p292
      %p294 = scmp.ne.s32.totalorder %s283, %s286
      %p295 = scmp.eq.s32.totalorder %s32, 3
      %p296 = por %p294, %p295
      %p297 = scmp.ne.s32.totalorder %s286, %s287
      %p298 = scmp.eq.s32.totalorder %s32, 0
      %p299 = por %p297, %p298
      %p300 = scmp.ne.s32.totalorder %s286, %s287
      %p301 = scmp.eq.s32.totalorder %s33, 3
      %p302 = por %p300, %p301
      %p304 = scmp.ne.s32.totalorder %s287, %s303
      %p305 = scmp.eq.s32.totalorder %s33, 0
      %p306 = por %p304, %p305
      %s307 = ssub.s32 %s35, %s42
      %p308 = scmp.eq.s32.totalorder %s307, 0
      %s310 = sadd.s32 %s309, 1
      %s311 = scalar_select %p308, %s309, %s310
      %p314 = pneg %p308
      %p315 = scmp.eq.s32.totalorder %s27, 3
      %p316 = por %p314, %p315
      %p317 = scmp.ne.s32.totalorder %s309, %s312
      %p318 = scmp.eq.s32.totalorder %s27, 0
      %p319 = por %p317, %p318
      %p320 = scmp.ne.s32.totalorder %s309, %s312
      %p321 = scmp.eq.s32.totalorder %s32, 3
      %p322 = por %p320, %p321
      %p323 = scmp.ne.s32.totalorder %s312, %s313
      %p324 = scmp.eq.s32.totalorder %s32, 0
      %p325 = por %p323, %p324
      %p326 = scmp.ne.s32.totalorder %s312, %s313
      %p327 = scmp.eq.s32.totalorder %s33, 3
      %p328 = por %p326, %p327
      %p330 = scmp.ne.s32.totalorder %s313, %s329
      %p331 = scmp.eq.s32.totalorder %s33, 0
      %p332 = por %p330, %p331
      %s333 = ssub.s32 %s35, %s42
      %p334 = scmp.eq.s32.totalorder %s333, 0
      %s336 = sadd.s32 %s335, 1
      %s337 = scalar_select %p334, %s335, %s336
      %p340 = pneg %p334
      %p341 = scmp.eq.s32.totalorder %s27, 3
      %p342 = por %p340, %p341
      %p343 = scmp.ne.s32.totalorder %s335, %s338
      %p344 = scmp.eq.s32.totalorder %s27, 0
      %p345 = por %p343, %p344
      %p346 = scmp.ne.s32.totalorder %s335, %s338
      %p347 = scmp.eq.s32.totalorder %s32, 3
      %p348 = por %p346, %p347
      %p349 = scmp.ne.s32.totalorder %s338, %s339
      %p350 = scmp.eq.s32.totalorder %s32, 0
      %p351 = por %p349, %p350
      %p352 = scmp.ne.s32.totalorder %s338, %s339
      %p353 = scmp.eq.s32.totalorder %s33, 3
      %p354 = por %p352, %p353
      %p356 = scmp.ne.s32.totalorder %s339, %s355
      %p357 = scmp.eq.s32.totalorder %s33, 0
      %p358 = por %p356, %p357
      %s359 = ssub.s32 %s35, %s42
      %p360 = scmp.eq.s32.totalorder %s359, 0
      %s362 = sadd.s32 %s361, 1
      %s363 = scalar_select %p360, %s361, %s362
      %p366 = pneg %p360
      %p367 = scmp.eq.s32.totalorder %s27, 3
      %p368 = por %p366, %p367
      %p369 = scmp.ne.s32.totalorder %s361, %s364
      %p370 = scmp.eq.s32.totalorder %s27, 0
      %p371 = por %p369, %p370
      %p372 = scmp.ne.s32.totalorder %s361, %s364
      %p373 = scmp.eq.s32.totalorder %s32, 3
      %p374 = por %p372, %p373
      %p375 = scmp.ne.s32.totalorder %s364, %s365
      %p376 = scmp.eq.s32.totalorder %s32, 0
      %p377 = por %p375, %p376
      %p378 = scmp.ne.s32.totalorder %s364, %s365
      %p379 = scmp.eq.s32.totalorder %s33, 3
      %p380 = por %p378, %p379
      %p382 = scmp.ne.s32.totalorder %s365, %s381
      %p383 = scmp.eq.s32.totalorder %s33, 0
      %p384 = por %p382, %p383
      %s385 = ssub.s32 %s34, %s46
      %p386 = scmp.eq.s32.totalorder %s385, 0
      %s388 = sadd.s32 %s387, 1
      %s389 = scalar_select %p386, %s387, %s388
      %p392 = pneg %p386
      %p393 = scmp.eq.s32.totalorder %s27, 3
      %p394 = por %p392, %p393
      %p395 = scmp.ne.s32.totalorder %s387, %s390
      %p396 = scmp.eq.s32.totalorder %s27, 0
      %p397 = por %p395, %p396
      %p398 = scmp.ne.s32.totalorder %s387, %s390
      %p399 = scmp.eq.s32.totalorder %s32, 3
      %p400 = por %p398, %p399
      %p401 = scmp.ne.s32.totalorder %s390, %s391
      %p402 = scmp.eq.s32.totalorder %s32, 0
      %p403 = por %p401, %p402
      %p404 = scmp.ne.s32.totalorder %s390, %s391
      %p405 = scmp.eq.s32.totalorder %s33, 3
      %p406 = por %p404, %p405
      %p408 = scmp.ne.s32.totalorder %s391, %s407
      %p409 = scmp.eq.s32.totalorder %s33, 0
      %p410 = por %p408, %p409
      %s411 = ssub.s32 %s35, %s42
      %s412 = ssub.s32 %s34, %s46
      %s413 = sor.u32 %s411, %s412
      %p414 = scmp.eq.s32.totalorder %s413, 0
      %s416 = sadd.s32 %s415, 1
      %s417 = scalar_select %p414, %s415, %s416
      %p420 = pneg %p414
      %p421 = scmp.eq.s32.totalorder %s27, 3
      %p422 = por %p420, %p421
      %p423 = scmp.ne.s32.totalorder %s415, %s418
      %p424 = scmp.eq.s32.totalorder %s27, 0
      %p425 = por %p423, %p424
      %p426 = scmp.ne.s32.totalorder %s415, %s418
      %p427 = scmp.eq.s32.totalorder %s32, 3
      %p428 = por %p426, %p427
      %p429 = scmp.ne.s32.totalorder %s418, %s419
      %p430 = scmp.eq.s32.totalorder %s32, 0
      %p431 = por %p429, %p430
      %p432 = scmp.ne.s32.totalorder %s418, %s419
      %p433 = scmp.eq.s32.totalorder %s33, 3
      %p434 = por %p432, %p433
      %p436 = scmp.ne.s32.totalorder %s419, %s435
      %p437 = scmp.eq.s32.totalorder %s33, 0
      %p438 = por %p436, %p437
      %p439 = scmp.le.s32.totalorder 1, %s27
      %p440 = scmp.lt.s32.totalorder %s27, 5
      %p441 = pnand %p439, %p440
      %p442 = pneg %p441
      // Predicated region
      $region9: #{tpu_custom_call.1} parent=5 // pred_check
        _
      $region10: #{tpu_custom_call.1} parent=5 // pred_check_branch
        %444 = sbr.rel (%p441) target = $region12
      $region11: #{tpu_custom_call.1} parent=5 // pred_region
        %s445 = ssub.s32 %s27, 1
      $region12: #{tpu_custom_call.1} parent=5 // pred_fallthru
        _
      %p446 = scmp.lt.s32.totalorder %s27, 4
      // Predicated region
      $region13: #{tpu_custom_call.1} parent=5 // pred_check
        %p447 = pneg %p446
      $region14: #{tpu_custom_call.1} parent=5 // pred_check_branch
        %449 = sbr.rel (%p447) target = $region16
      $region15: #{tpu_custom_call.1} parent=5 // pred_region
        // Predicated region
        $region17: #{tpu_custom_call.1} parent=15 // pred_check
          %p450 = pneg %p59
        $region18: #{tpu_custom_call.1} parent=15 // pred_check_branch
          %452 = sbr.rel (%p450) target = $region20
        $region19: #{tpu_custom_call.1} parent=15 // pred_region
          %p453 = scmp.lt.s32.totalorder %s34, 1
          %s454 = scalar_select %p453, %s34, 1
          %s455 = smul.addr %s454, 8
          %s456 = scalar_lea.vmem %s0, %s455
        $region20: #{tpu_custom_call.1} parent=15 // pred_fallthru
          _
        // Predicated region
        $region21: #{tpu_custom_call.1} parent=15 // pred_check
          %p457 = pneg %p85
        $region22: #{tpu_custom_call.1} parent=15 // pred_check_branch
          %459 = sbr.rel (%p457) target = $region24
        $region23: #{tpu_custom_call.1} parent=15 // pred_region
          %p460 = scmp.lt.s32.totalorder %s35, 1
          %s461 = scalar_select %p460, %s35, 1
          %s462 = scalar_lea.vmem %s1, %s461
        $region24: #{tpu_custom_call.1} parent=15 // pred_fallthru
          _
        // Predicated region
        $region25: #{tpu_custom_call.1} parent=15 // pred_check
          %p463 = pneg %p111
        $region26: #{tpu_custom_call.1} parent=15 // pred_check_branch
          %465 = sbr.rel (%p463) target = $region28
        $region27: #{tpu_custom_call.1} parent=15 // pred_region
          %p466 = scmp.lt.s32.totalorder %s35, 1
          %s467 = scalar_select %p466, %s35, 1
          %s468 = scalar_lea.vmem %s2, %s467
        $region28: #{tpu_custom_call.1} parent=15 // pred_fallthru
          _
        // Predicated region
        $region29: #{tpu_custom_call.1} parent=15 // pred_check
          %p469 = pneg %p137
        $region30: #{tpu_custom_call.1} parent=15 // pred_check_branch
          %471 = sbr.rel (%p469) target = $region32
        $region31: #{tpu_custom_call.1} parent=15 // pred_region
          %p472 = scmp.lt.s32.totalorder %s35, 1
          %s473 = scalar_select %p472, %s35, 1
          %s474 = smul.addr %s473, 4
          %s475 = smul.addr %s474, 4
          %s476 = scalar_lea.vmem %s3, %s475
        $region32: #{tpu_custom_call.1} parent=15 // pred_fallthru
          _
        // Predicated region
        $region33: #{tpu_custom_call.1} parent=15 // pred_check
          %p477 = pneg %p163
        $region34: #{tpu_custom_call.1} parent=15 // pred_check_branch
          %479 = sbr.rel (%p477) target = $region36
        $region35: #{tpu_custom_call.1} parent=15 // pred_region
          %p480 = scmp.lt.s32.totalorder %s35, 1
          %s481 = scalar_select %p480, %s35, 1
          %s482 = scalar_lea.vmem %s4, %s481
        $region36: #{tpu_custom_call.1} parent=15 // pred_fallthru
          _
        // Predicated region
        $region37: #{tpu_custom_call.1} parent=15 // pred_check
          %p483 = pneg %p189
        $region38: #{tpu_custom_call.1} parent=15 // pred_check_branch
          %485 = sbr.rel (%p483) target = $region40
        $region39: #{tpu_custom_call.1} parent=15 // pred_region
          %p486 = scmp.lt.s32.totalorder %s35, 1
          %s487 = scalar_select %p486, %s35, 1
          %s488 = smul.addr %s487, 4
          %s489 = smul.addr %s488, 4
          %s490 = scalar_lea.vmem %s5, %s489
        $region40: #{tpu_custom_call.1} parent=15 // pred_fallthru
          _
        // Predicated region
        $region41: #{tpu_custom_call.1} parent=15 // pred_check
          %p491 = pneg %p215
        $region42: #{tpu_custom_call.1} parent=15 // pred_check_branch
          %493 = sbr.rel (%p491) target = $region44
        $region43: #{tpu_custom_call.1} parent=15 // pred_region
          %p494 = scmp.lt.s32.totalorder %s35, 1
          %s495 = scalar_select %p494, %s35, 1
          %s496 = scalar_lea.vmem %s6, %s495
        $region44: #{tpu_custom_call.1} parent=15 // pred_fallthru
          _
        // Predicated region
        $region45: #{tpu_custom_call.1} parent=15 // pred_check
          %p497 = pneg %p241
        $region46: #{tpu_custom_call.1} parent=15 // pred_check_branch
          %499 = sbr.rel (%p497) target = $region48
        $region47: #{tpu_custom_call.1} parent=15 // pred_region
          %p500 = scmp.lt.s32.totalorder %s35, 1
          %s501 = scalar_select %p500, %s35, 1
          %s502 = scalar_lea.vmem %s7, %s501
        $region48: #{tpu_custom_call.1} parent=15 // pred_fallthru
          _
        // Predicated region
        $region49: #{tpu_custom_call.1} parent=15 // pred_check
          %p503 = pneg %p267
        $region50: #{tpu_custom_call.1} parent=15 // pred_check_branch
          %505 = sbr.rel (%p503) target = $region52
        $region51: #{tpu_custom_call.1} parent=15 // pred_region
          %p506 = scmp.lt.s32.totalorder %s35, 1
          %s507 = scalar_select %p506, %s35, 1
          %s508 = scalar_lea.vmem %s8, %s507
        $region52: #{tpu_custom_call.1} parent=15 // pred_fallthru
          _
        // Predicated region
        $region53: #{tpu_custom_call.1} parent=15 // pred_check
          %p509 = pneg %p293
        $region54: #{tpu_custom_call.1} parent=15 // pred_check_branch
          %511 = sbr.rel (%p509) target = $region56
        $region55: #{tpu_custom_call.1} parent=15 // pred_region
          %p512 = scmp.lt.s32.totalorder %s35, 1
          %s513 = scalar_select %p512, %s35, 1
          %s514 = smul.addr %s513, 4
          %s515 = smul.addr %s514, 4
          %s516 = scalar_lea.vmem %s9, %s515
        $region56: #{tpu_custom_call.1} parent=15 // pred_fallthru
          _
        // Predicated region
        $region57: #{tpu_custom_call.1} parent=15 // pred_check
          %p517 = pneg %p319
        $region58: #{tpu_custom_call.1} parent=15 // pred_check_branch
          %519 = sbr.rel (%p517) target = $region60
        $region59: #{tpu_custom_call.1} parent=15 // pred_region
          %p520 = scmp.lt.s32.totalorder %s35, 1
          %s521 = scalar_select %p520, %s35, 1
          %s522 = scalar_lea.vmem %s10, %s521
        $region60: #{tpu_custom_call.1} parent=15 // pred_fallthru
          _
        // Predicated region
        $region61: #{tpu_custom_call.1} parent=15 // pred_check
          %p523 = pneg %p345
        $region62: #{tpu_custom_call.1} parent=15 // pred_check_branch
          %525 = sbr.rel (%p523) target = $region64
        $region63: #{tpu_custom_call.1} parent=15 // pred_region
          %p526 = scmp.lt.s32.totalorder %s35, 1
          %s527 = scalar_select %p526, %s35, 1
          %s528 = smul.addr %s527, 16
          %s529 = smul.addr %s528, 4
          %s530 = scalar_lea.vmem %s11, %s529
        $region64: #{tpu_custom_call.1} parent=15 // pred_fallthru
          _
        // Predicated region
        $region65: #{tpu_custom_call.1} parent=15 // pred_check
          %p531 = pneg %p371
        $region66: #{tpu_custom_call.1} parent=15 // pred_check_branch
          %533 = sbr.rel (%p531) target = $region68
        $region67: #{tpu_custom_call.1} parent=15 // pred_region
          %p534 = scmp.lt.s32.totalorder %s35, 1
          %s535 = scalar_select %p534, %s35, 1
          %s536 = scalar_lea.vmem %s12, %s535
        $region68: #{tpu_custom_call.1} parent=15 // pred_fallthru
          _
      $region16: #{tpu_custom_call.1} parent=5 // pred_fallthru
        _
      %p537 = scmp.le.s32.totalorder 1, %s27
      %p538 = scmp.lt.s32.totalorder %s27, 5
      %p539 = pnand %p537, %p538
      %p540 = pneg %p539
      // Predicated region
      $region69: #{tpu_custom_call.1} parent=5 // pred_check
        _
      $region70: #{tpu_custom_call.1} parent=5 // pred_check_branch
        %542 = sbr.rel (%p539) target = $region72
      $region71: #{tpu_custom_call.1} parent=5 // pred_region
        %s543 = ssub.s32 %s27, 1
        %p544 = scmp.lt.s32.totalorder %s36, 1
        %s545 = scalar_select %p544, %s36, 1
        %s546 = smul.addr %s545, 8
        %s547 = scalar_lea.vmem %s0, %s546
        %p548 = pneg %p65
        %p549 = pneg %p62
        %p550 = scmp.lt.s32.totalorder %s37, 1
        %s551 = scalar_select %p550, %s37, 1
        %s552 = scalar_lea.vmem %s1, %s551
        %p553 = pneg %p91
        %p554 = pneg %p88
        %p555 = scmp.lt.s32.totalorder %s37, 1
        %s556 = scalar_select %p555, %s37, 1
        %s557 = scalar_lea.vmem %s2, %s556
        %p558 = pneg %p117
        %p559 = pneg %p114
        %p560 = scmp.lt.s32.totalorder %s37, 1
        %s561 = scalar_select %p560, %s37, 1
        %s562 = smul.addr %s561, 4
        %s563 = smul.addr %s562, 4
        %s564 = scalar_lea.vmem %s3, %s563
        %p565 = pneg %p143
        %p566 = pneg %p140
        %p567 = scmp.lt.s32.totalorder %s37, 1
        %s568 = scalar_select %p567, %s37, 1
        %s569 = scalar_lea.vmem %s4, %s568
        %p570 = pneg %p169
        %p571 = pneg %p166
        %p572 = scmp.lt.s32.totalorder %s37, 1
        %s573 = scalar_select %p572, %s37, 1
        %s574 = smul.addr %s573, 4
        %s575 = smul.addr %s574, 4
        %s576 = scalar_lea.vmem %s5, %s575
        %p577 = pneg %p195
        %p578 = pneg %p192
        %p579 = scmp.lt.s32.totalorder %s37, 1
        %s580 = scalar_select %p579, %s37, 1
        %s581 = scalar_lea.vmem %s6, %s580
        %p582 = pneg %p221
        %p583 = pneg %p218
        %p584 = scmp.lt.s32.totalorder %s37, 1
        %s585 = scalar_select %p584, %s37, 1
        %s586 = scalar_lea.vmem %s7, %s585
        %p587 = pneg %p247
        %p588 = pneg %p244
        %p589 = scmp.lt.s32.totalorder %s37, 1
        %s590 = scalar_select %p589, %s37, 1
        %s591 = scalar_lea.vmem %s8, %s590
        %p592 = pneg %p273
        %p593 = pneg %p270
        %p594 = scmp.lt.s32.totalorder %s37, 1
        %s595 = scalar_select %p594, %s37, 1
        %s596 = smul.addr %s595, 4
        %s597 = smul.addr %s596, 4
        %s598 = scalar_lea.vmem %s9, %s597
        %p599 = pneg %p299
        %p600 = pneg %p296
        %p601 = scmp.lt.s32.totalorder %s37, 1
        %s602 = scalar_select %p601, %s37, 1
        %s603 = scalar_lea.vmem %s10, %s602
        %p604 = pneg %p325
        %p605 = pneg %p322
        %p606 = scmp.lt.s32.totalorder %s37, 1
        %s607 = scalar_select %p606, %s37, 1
        %s608 = smul.addr %s607, 16
        %s609 = smul.addr %s608, 4
        %s610 = scalar_lea.vmem %s11, %s609
        %p611 = pneg %p351
        %p612 = pneg %p348
        %p613 = scmp.lt.s32.totalorder %s37, 1
        %s614 = scalar_select %p613, %s37, 1
        %s615 = scalar_lea.vmem %s12, %s614
        %p616 = pneg %p377
        %p617 = pneg %p374
        %p618 = pneg %p403
        %p619 = pneg %p400
        %s620 = sand.u32 %s390, 1
        %s621 = scalar_lea.sflag [#allocation4], %s620
        %s622 = sand.u32 %s390, 1
        %s623 = smul.addr %s622, 8
        %s624 = scalar_lea.vmem [#allocation3], %s623
        %p625 = pneg %p431
        %p626 = pneg %p428
        %s627 = sand.u32 %s418, 1
        %s628 = scalar_lea.sflag [#allocation6], %s627
        %s629 = sand.u32 %s418, 1
        %s630 = scalar_lea.vmem [#allocation5], %s629
        %p631 = scmp.lt.s32.totalorder %s36, 1
        %s632 = scalar_select %p631, %s36, 1
        %s633 = smul.addr %s632, 8
        %s634 = scalar_lea.vmem %s0, %s633
        %p635 = scmp.lt.s32.totalorder %s37, 1
        %s636 = scalar_select %p635, %s37, 1
        %s637 = scalar_lea.vmem %s1, %s636
        %p638 = scmp.lt.s32.totalorder %s37, 1
        %s639 = scalar_select %p638, %s37, 1
        %s640 = scalar_lea.vmem %s2, %s639
        %p641 = scmp.lt.s32.totalorder %s37, 1
        %s642 = scalar_select %p641, %s37, 1
        %s643 = smul.addr %s642, 4
        %s644 = smul.addr %s643, 4
        %s645 = scalar_lea.vmem %s3, %s644
        %p646 = scmp.lt.s32.totalorder %s37, 1
        %s647 = scalar_select %p646, %s37, 1
        %s648 = scalar_lea.vmem %s4, %s647
        %p649 = scmp.lt.s32.totalorder %s37, 1
        %s650 = scalar_select %p649, %s37, 1
        %s651 = smul.addr %s650, 4
        %s652 = smul.addr %s651, 4
        %s653 = scalar_lea.vmem %s5, %s652
        %p654 = scmp.lt.s32.totalorder %s37, 1
        %s655 = scalar_select %p654, %s37, 1
        %s656 = scalar_lea.vmem %s6, %s655
        %p657 = scmp.lt.s32.totalorder %s37, 1
        %s658 = scalar_select %p657, %s37, 1
        %s659 = scalar_lea.vmem %s7, %s658
        %p660 = scmp.lt.s32.totalorder %s37, 1
        %s661 = scalar_select %p660, %s37, 1
        %s662 = scalar_lea.vmem %s8, %s661
        %p663 = scmp.lt.s32.totalorder %s37, 1
        %s664 = scalar_select %p663, %s37, 1
        %s665 = smul.addr %s664, 4
        %s666 = smul.addr %s665, 4
        %s667 = scalar_lea.vmem %s9, %s666
        %p668 = scmp.lt.s32.totalorder %s37, 1
        %s669 = scalar_select %p668, %s37, 1
        %s670 = scalar_lea.vmem %s10, %s669
        %p671 = scmp.lt.s32.totalorder %s37, 1
        %s672 = scalar_select %p671, %s37, 1
        %s673 = smul.addr %s672, 16
        %s674 = smul.addr %s673, 4
        %s675 = scalar_lea.vmem %s11, %s674
        %p676 = scmp.lt.s32.totalorder %s37, 1
        %s677 = scalar_select %p676, %s37, 1
        %s678 = scalar_lea.vmem %s12, %s677
        %p680 = scmp.eq.s32.totalorder %s37, 0
        // Predicated region
        $region73: #{tpu_custom_call.1} parent=71 // pred_check
          %p681 = pneg %p680
        $region74: #{tpu_custom_call.1} parent=71 // pred_check_branch
          %683 = sbr.rel (%p681) target = $region76
        $region75: #{tpu_custom_call.1} parent=71 // pred_region
          %v684 = vld [vmem:[%s634] sm:$0xff]
          %vm685 = vcmask 261120
          %686 = vst.msk [vmem:[%s624] sm:$0xff] %vm685, %v684
        $region76: #{tpu_custom_call.1} parent=71 // pred_fallthru
          _
        %v687 = vld [vmem:[%s624] sm:$0xff]
        %v688 = vld [vmem:[%s637] sm:$0x1]
        %v689 = vld [vmem:[%s640] sm:$0x1]
        %vm690 = vcmask 261120
        %v691 = vsel %vm690, %v687, 0.0
        %692 = vadd.xlane.f32.xlu0 %v691
        %v693 = vpop.xlane.xlu0 %692
        %v694 = vrcp.pop 32.0
        %v695 = vmul.f32 %v693, %v694
        %v696 = vsub.f32 %v687, %v695
        %v697 = vmul.f32 %v696, %v696
        %v698 = vsel %vm690, %v697, 0.0
        %699 = vadd.xlane.f32.xlu0 %v698
        %v700 = vpop.xlane.xlu0 %699
        %v701 = vmul.f32 %v700, %v694
        %v702 = vadd.f32 %v701, 1e-05
        %v703 = vrsqrt.pop %v702
        %v704 = vmul.f32 %v696, %v703
        %v706 = vlaneseq
        %v707 = vshrl.u32 %v706, 7
        %v708 = vsub.s32 0, %v707
        %v709 = vrot.slane %v688, %v708
        %v711 = vmul.f32 %v704, %v709
        %v713 = vlaneseq
        %v714 = vshrl.u32 %v713, 7
        %v715 = vsub.s32 0, %v714
        %v716 = vrot.slane %v689, %v715
        %v718 = vadd.f32 %v711, %v716
        %v719 = vpack.c.bf16 %v718, %v718
        %v720 = vld [vmem:[%s645] sm:$0xf]
        %v721 = vld [vmem:[%s645 + $0x4] sm:$0xf]
        %v722 = vld [vmem:[%s645 + $0x8] sm:$0xf]
        %v723 = vld [vmem:[%s645 + $0xc] sm:$0xf]
        %v724 = vld [vmem:[%s648] sm:$0x1]
        %v726 = vlaneseq
        %v727 = vshrl.u32 %v726, 7
        %v728 = vsub.s32 0, %v727
        %v729 = vrot.slane %v724, %v728
        %v735 = vunpack.c.l.b16 %v720
        %v736 = vunpack.c.l.b16 %v721
        %v737 = vunpack.c.l.b16 %v722
        %v738 = vunpack.c.l.b16 %v723
        %v739 = vpack.c.b16 %v736, %v735
        %v740 = vpack.c.b16 %v738, %v737
        %v744 = vsel %vm690, %v719, 0
        %746 = vmatprep.subr.bf16.mxu0 0
        %747 = vmatpush1.bf16.msra.mxu0 0
        %748 = vmatprep.subr.bf16.mxu0 0
        %749 = vmatpush1.bf16.msra.mxu0 0
        %750 = vmatprep.subr.bf16.mxu0 0
        %751 = vmatpush1.bf16.msra.mxu0 0
        %752 = vmatprep.subr.bf16.mxu0 0
        %753 = vmatpush1.bf16.msra.mxu0 0
        %754 = vmatprep.subr.bf16.mxu0 0
        %755 = vmatpush1.bf16.msra.mxu0 0
        %756 = vmatprep.subr.bf16.mxu0 0
        %757 = vmatpush1.bf16.msra.mxu0 0
        %758 = vmatprep.subr.bf16.mxu0 0
        %759 = vmatpush1.bf16.msra.mxu0 %v740
        %760 = vmatprep.subr.bf16.mxu0 0
        %761 = vmatpush1.bf16.msra.mxu0 %v739
        %762 = vmatprep.subr.bf16.mxu0 0
        %763 = vmatpush2.bf16.msra.mxu0 0
        %764 = vmatprep.subr.bf16.mxu0 0
        %765 = vmatpush2.bf16.msra.mxu0 0
        %766 = vmatprep.subr.bf16.mxu0 0
        %767 = vmatpush2.bf16.msra.mxu0 0
        %768 = vmatprep.subr.bf16.mxu0 0
        %769 = vmatpush2.bf16.msra.mxu0 0
        %770 = vmatprep.subr.bf16.mxu0 0
        %771 = vmatpush2.bf16.msra.mxu0 0
        %772 = vmatprep.subr.bf16.mxu0 0
        %773 = vmatpush2.bf16.msra.mxu0 0
        %774 = vmatprep.subr.bf16.mxu0 0
        %775 = vmatpush2.bf16.msra.mxu0 0
        %776 = vmatprep.subr.bf16.mxu0 0
        %777 = vmatpush2.bf16.msra.mxu0 0
        %778 = vmatprep.mubr.bf16.mxu0 0
        %779 = vmatmul.mubr.bf16.gmra.mxu0 %v744
        %v780 = vpop.f32.mrf.mxu0
        %v781 = vadd.f32 %v729, %v780
        %v782 = vpop.f32.mrf.mxu0
        %v783 = vpop.f32.mrf.mxu0
        %v784 = vpop.f32.mrf.mxu0
        %785 = vdwg.mxu0
        %v786 = vpack.c.bf16 %v781, %v781
        %788 = vrot.lane.b32.xlu0 %v786, 96
        %v789 = vpop.permute.xlu0 %788
        %vm790 = vcmask 64512
        %v792 = vsel %vm790, %v786, 0
        %v795 = vsel %vm790, %v789, 0
        %797 = vmatprep.subr.bf16.mxu0 0
        %798 = vmatpush1.bf16.xpose.msra.mxu0 0
        %799 = vmatprep.subr.bf16.mxu0 0
        %800 = vmatpush1.bf16.xpose.msra.mxu0 0
        %801 = vmatprep.subr.bf16.mxu0 0
        %802 = vmatpush1.bf16.xpose.msra.mxu0 0
        %803 = vmatprep.subr.bf16.mxu0 0
        %804 = vmatpush1.bf16.xpose.msra.mxu0 0
        %805 = vmatprep.subr.bf16.mxu0 0
        %806 = vmatpush1.bf16.xpose.msra.mxu0 0
        %807 = vmatprep.subr.bf16.mxu0 0
        %808 = vmatpush1.bf16.xpose.msra.mxu0 0
        %809 = vmatprep.subr.bf16.mxu0 0
        %810 = vmatpush1.bf16.xpose.msra.mxu0 0
        %811 = vmatprep.subr.bf16.mxu0 0
        %812 = vmatpush1.bf16.xpose.msra.mxu0 %v795
        %813 = vmatprep.subr.bf16.mxu0 0
        %814 = vmatpush2.bf16.xpose.msra.mxu0 0
        %815 = vmatprep.subr.bf16.mxu0 0
        %816 = vmatpush2.bf16.xpose.msra.mxu0 0
        %817 = vmatprep.subr.bf16.mxu0 0
        %818 = vmatpush2.bf16.xpose.msra.mxu0 0
        %819 = vmatprep.subr.bf16.mxu0 0
        %820 = vmatpush2.bf16.xpose.msra.mxu0 0
        %821 = vmatprep.subr.bf16.mxu0 0
        %822 = vmatpush2.bf16.xpose.msra.mxu0 0
        %823 = vmatprep.subr.bf16.mxu0 0
        %824 = vmatpush2.bf16.xpose.msra.mxu0 0
        %825 = vmatprep.subr.bf16.mxu0 0
        %826 = vmatpush2.bf16.xpose.msra.mxu0 0
        %827 = vmatprep.subr.bf16.mxu0 0
        %828 = vmatpush2.bf16.xpose.msra.mxu0 0
        %829 = vmatprep.mubr.bf16.mxu0 0
        %830 = vmatmul.mubr.bf16.gmra.mxu0 %v792
        %v831 = vpop.f32.mrf.mxu0
        %v832 = vadd.f32 0.0, %v831
        %v833 = vpop.f32.mrf.mxu0
        %v834 = vpop.f32.mrf.mxu0
        %v835 = vpop.f32.mrf.mxu0
        %836 = vdwg.mxu0
        %v837 = vsel %vm790, %v832, -inf
        %838 = vmax.xlane.f32.xlu0 %v837
        %v839 = vpop.xlane.xlu0 %838
        %v840 = vsub.f32 %v832, %v839
        %v841 = vmul.f32 %v840, 1.442695
        %v842 = vpow.pop %v841
        %v843 = vsel %vm790, %v842, 0.0
        %844 = vadd.xlane.f32.xlu0 %v843
        %v845 = vpop.xlane.xlu0 %844
        %v846 = vrcp.pop %v845
        %v847 = vmul.f32 %v842, %v846
        %v848 = vpack.c.bf16 %v847, %v847
        %849 = vrot.lane.b32.xlu0 %v786, 64
        %v850 = vpop.permute.xlu0 %849
        %v852 = vsel %vm790, %v848, 0
        %vm854 = vcmask 1043456
        %v856 = vsel %vm854, %v850, 0
        %858 = vmatprep.subr.bf16.mxu0 0
        %859 = vmatpush1.bf16.msra.mxu0 0
        %860 = vmatprep.subr.bf16.mxu0 0
        %861 = vmatpush1.bf16.msra.mxu0 0
        %862 = vmatprep.subr.bf16.mxu0 0
        %863 = vmatpush1.bf16.msra.mxu0 0
        %864 = vmatprep.subr.bf16.mxu0 0
        %865 = vmatpush1.bf16.msra.mxu0 0
        %866 = vmatprep.subr.bf16.mxu0 0
        %867 = vmatpush1.bf16.msra.mxu0 0
        %868 = vmatprep.subr.bf16.mxu0 0
        %869 = vmatpush1.bf16.msra.mxu0 0
        %870 = vmatprep.subr.bf16.mxu0 0
        %871 = vmatpush1.bf16.msra.mxu0 0
        %872 = vmatprep.subr.bf16.mxu0 0
        %873 = vmatpush1.bf16.msra.mxu0 %v856
        %874 = vmatprep.subr.bf16.mxu0 0
        %875 = vmatpush2.bf16.msra.mxu0 0
        %876 = vmatprep.subr.bf16.mxu0 0
        %877 = vmatpush2.bf16.msra.mxu0 0
        %878 = vmatprep.subr.bf16.mxu0 0
        %879 = vmatpush2.bf16.msra.mxu0 0
        %880 = vmatprep.subr.bf16.mxu0 0
        %881 = vmatpush2.bf16.msra.mxu0 0
        %882 = vmatprep.subr.bf16.mxu0 0
        %883 = vmatpush2.bf16.msra.mxu0 0
        %884 = vmatprep.subr.bf16.mxu0 0
        %885 = vmatpush2.bf16.msra.mxu0 0
        %886 = vmatprep.subr.bf16.mxu0 0
        %887 = vmatpush2.bf16.msra.mxu0 0
        %888 = vmatprep.subr.bf16.mxu0 0
        %889 = vmatpush2.bf16.msra.mxu0 0
        %890 = vmatprep.mubr.bf16.mxu0 0
        %891 = vmatmul.mubr.bf16.gmra.mxu0 %v852
        %v892 = vpop.f32.mrf.mxu0
        %v893 = vadd.f32 0.0, %v892
        %v894 = vpop.f32.mrf.mxu0
        %v895 = vpop.f32.mrf.mxu0
        %v896 = vpop.f32.mrf.mxu0
        %897 = vdwg.mxu0
        %v898 = vpack.c.bf16 %v893, %v893
        %vm899 = vcmask 60416
        %900 = vst.msk [vmem:[#allocation2] sm:$0xf] %vm899, %v898
        %901 = vrot.lane.b32.xlu0 %v786, 120
        %v902 = vpop.permute.xlu0 %901
        %903 = vrot.lane.b32.xlu0 %v786, 88
        %v904 = vpop.permute.xlu0 %903
        %v906 = vsel %vm790, %v902, 0
        %v909 = vsel %vm790, %v904, 0
        %911 = vmatprep.subr.bf16.mxu0 0
        %912 = vmatpush1.bf16.xpose.msra.mxu0 0
        %913 = vmatprep.subr.bf16.mxu0 0
        %914 = vmatpush1.bf16.xpose.msra.mxu0 0
        %915 = vmatprep.subr.bf16.mxu0 0
        %916 = vmatpush1.bf16.xpose.msra.mxu0 0
        %917 = vmatprep.subr.bf16.mxu0 0
        %918 = vmatpush1.bf16.xpose.msra.mxu0 0
        %919 = vmatprep.subr.bf16.mxu0 0
        %920 = vmatpush1.bf16.xpose.msra.mxu0 0
        %921 = vmatprep.subr.bf16.mxu0 0
        %922 = vmatpush1.bf16.xpose.msra.mxu0 0
        %923 = vmatprep.subr.bf16.mxu0 0
        %924 = vmatpush1.bf16.xpose.msra.mxu0 0
        %925 = vmatprep.subr.bf16.mxu0 0
        %926 = vmatpush1.bf16.xpose.msra.mxu0 %v909
        %927 = vmatprep.subr.bf16.mxu0 0
        %928 = vmatpush2.bf16.xpose.msra.mxu0 0
        %929 = vmatprep.subr.bf16.mxu0 0
        %930 = vmatpush2.bf16.xpose.msra.mxu0 0
        %931 = vmatprep.subr.bf16.mxu0 0
        %932 = vmatpush2.bf16.xpose.msra.mxu0 0
        %933 = vmatprep.subr.bf16.mxu0 0
        %934 = vmatpush2.bf16.xpose.msra.mxu0 0
        %935 = vmatprep.subr.bf16.mxu0 0
        %936 = vmatpush2.bf16.xpose.msra.mxu0 0
        %937 = vmatprep.subr.bf16.mxu0 0
        %938 = vmatpush2.bf16.xpose.msra.mxu0 0
        %939 = vmatprep.subr.bf16.mxu0 0
        %940 = vmatpush2.bf16.xpose.msra.mxu0 0
        %941 = vmatprep.subr.bf16.mxu0 0
        %942 = vmatpush2.bf16.xpose.msra.mxu0 0
        %943 = vmatprep.mubr.bf16.mxu0 0
        %944 = vmatmul.mubr.bf16.gmra.mxu0 %v906
        %v945 = vpop.f32.mrf.mxu0
        %v946 = vadd.f32 0.0, %v945
        %v947 = vpop.f32.mrf.mxu0
        %v948 = vpop.f32.mrf.mxu0
        %v949 = vpop.f32.mrf.mxu0
        %950 = vdwg.mxu0
        %v951 = vsel %vm790, %v946, -inf
        %952 = vmax.xlane.f32.xlu0 %v951
        %v953 = vpop.xlane.xlu0 %952
        %v954 = vsub.f32 %v946, %v953
        %v955 = vmul.f32 %v954, 1.442695
        %v956 = vpow.pop %v955
        %v957 = vsel %vm790, %v956, 0.0
        %958 = vadd.xlane.f32.xlu0 %v957
        %v959 = vpop.xlane.xlu0 %958
        %v960 = vrcp.pop %v959
        %v961 = vmul.f32 %v956, %v960
        %v962 = vpack.c.bf16 %v961, %v961
        %963 = vrot.lane.b32.xlu0 %v786, 56
        %v964 = vpop.permute.xlu0 %963
        %v966 = vsel %vm790, %v962, 0
        %v969 = vsel %vm854, %v964, 0
        %971 = vmatprep.subr.bf16.mxu0 0
        %972 = vmatpush1.bf16.msra.mxu0 0
        %973 = vmatprep.subr.bf16.mxu0 0
        %974 = vmatpush1.bf16.msra.mxu0 0
        %975 = vmatprep.subr.bf16.mxu0 0
        %976 = vmatpush1.bf16.msra.mxu0 0
        %977 = vmatprep.subr.bf16.mxu0 0
        %978 = vmatpush1.bf16.msra.mxu0 0
        %979 = vmatprep.subr.bf16.mxu0 0
        %980 = vmatpush1.bf16.msra.mxu0 0
        %981 = vmatprep.subr.bf16.mxu0 0
        %982 = vmatpush1.bf16.msra.mxu0 0
        %983 = vmatprep.subr.bf16.mxu0 0
        %984 = vmatpush1.bf16.msra.mxu0 0
        %985 = vmatprep.subr.bf16.mxu0 0
        %986 = vmatpush1.bf16.msra.mxu0 %v969
        %987 = vmatprep.subr.bf16.mxu0 0
        %988 = vmatpush2.bf16.msra.mxu0 0
        %989 = vmatprep.subr.bf16.mxu0 0
        %990 = vmatpush2.bf16.msra.mxu0 0
        %991 = vmatprep.subr.bf16.mxu0 0
        %992 = vmatpush2.bf16.msra.mxu0 0
        %993 = vmatprep.subr.bf16.mxu0 0
        %994 = vmatpush2.bf16.msra.mxu0 0
        %995 = vmatprep.subr.bf16.mxu0 0
        %996 = vmatpush2.bf16.msra.mxu0 0
        %997 = vmatprep.subr.bf16.mxu0 0
        %998 = vmatpush2.bf16.msra.mxu0 0
        %999 = vmatprep.subr.bf16.mxu0 0
        %1000 = vmatpush2.bf16.msra.mxu0 0
        %1001 = vmatprep.subr.bf16.mxu0 0
        %1002 = vmatpush2.bf16.msra.mxu0 0
        %1003 = vmatprep.mubr.bf16.mxu0 0
        %1004 = vmatmul.mubr.bf16.gmra.mxu0 %v966
        %v1005 = vpop.f32.mrf.mxu0
        %v1006 = vadd.f32 0.0, %v1005
        %v1007 = vpop.f32.mrf.mxu0
        %v1008 = vpop.f32.mrf.mxu0
        %v1009 = vpop.f32.mrf.mxu0
        %1010 = vdwg.mxu0
        %v1011 = vpack.c.bf16 %v1006, %v1006
        %v1013 = vunpack.c.l.b16 %v1011
        %v1014 = vpack.c.b16 %v1013, %v1013
        %1015 = vrot.lane.b32.xlu0 %v1014, 8
        %v1016 = vpop.permute.xlu0 %1015
        %vm1018 = vcmask 126016
        %1019 = vst.msk [vmem:[#allocation2] sm:$0xf] %vm1018, %v1016
        %1020 = vrot.lane.b32.xlu0 %v786, 112
        %v1021 = vpop.permute.xlu0 %1020
        %1022 = vrot.lane.b32.xlu0 %v786, 80
        %v1023 = vpop.permute.xlu0 %1022
        %v1025 = vsel %vm790, %v1021, 0
        %v1028 = vsel %vm790, %v1023, 0
        %1030 = vmatprep.subr.bf16.mxu0 0
        %1031 = vmatpush1.bf16.xpose.msra.mxu0 0
        %1032 = vmatprep.subr.bf16.mxu0 0
        %1033 = vmatpush1.bf16.xpose.msra.mxu0 0
        %1034 = vmatprep.subr.bf16.mxu0 0
        %1035 = vmatpush1.bf16.xpose.msra.mxu0 0
        %1036 = vmatprep.subr.bf16.mxu0 0
        %1037 = vmatpush1.bf16.xpose.msra.mxu0 0
        %1038 = vmatprep.subr.bf16.mxu0 0
        %1039 = vmatpush1.bf16.xpose.msra.mxu0 0
        %1040 = vmatprep.subr.bf16.mxu0 0
        %1041 = vmatpush1.bf16.xpose.msra.mxu0 0
        %1042 = vmatprep.subr.bf16.mxu0 0
        %1043 = vmatpush1.bf16.xpose.msra.mxu0 0
        %1044 = vmatprep.subr.bf16.mxu0 0
        %1045 = vmatpush1.bf16.xpose.msra.mxu0 %v1028
        %1046 = vmatprep.subr.bf16.mxu0 0
        %1047 = vmatpush2.bf16.xpose.msra.mxu0 0
        %1048 = vmatprep.subr.bf16.mxu0 0
        %1049 = vmatpush2.bf16.xpose.msra.mxu0 0
        %1050 = vmatprep.subr.bf16.mxu0 0
        %1051 = vmatpush2.bf16.xpose.msra.mxu0 0
        %1052 = vmatprep.subr.bf16.mxu0 0
        %1053 = vmatpush2.bf16.xpose.msra.mxu0 0
        %1054 = vmatprep.subr.bf16.mxu0 0
        %1055 = vmatpush2.bf16.xpose.msra.mxu0 0
        %1056 = vmatprep.subr.bf16.mxu0 0
        %1057 = vmatpush2.bf16.xpose.msra.mxu0 0
        %1058 = vmatprep.subr.bf16.mxu0 0
        %1059 = vmatpush2.bf16.xpose.msra.mxu0 0
        %1060 = vmatprep.subr.bf16.mxu0 0
        %1061 = vmatpush2.bf16.xpose.msra.mxu0 0
        %1062 = vmatprep.mubr.bf16.mxu0 0
        %1063 = vmatmul.mubr.bf16.gmra.mxu0 %v1025
        %v1064 = vpop.f32.mrf.mxu0
        %v1065 = vadd.f32 0.0, %v1064
        %v1066 = vpop.f32.mrf.mxu0
        %v1067 = vpop.f32.mrf.mxu0
        %v1068 = vpop.f32.mrf.mxu0
        %1069 = vdwg.mxu0
        %v1070 = vsel %vm790, %v1065, -inf
        %1071 = vmax.xlane.f32.xlu0 %v1070
        %v1072 = vpop.xlane.xlu0 %1071
        %v1073 = vsub.f32 %v1065, %v1072
        %v1074 = vmul.f32 %v1073, 1.442695
        %v1075 = vpow.pop %v1074
        %v1076 = vsel %vm790, %v1075, 0.0
        %1077 = vadd.xlane.f32.xlu0 %v1076
        %v1078 = vpop.xlane.xlu0 %1077
        %v1079 = vrcp.pop %v1078
        %v1080 = vmul.f32 %v1075, %v1079
        %v1081 = vpack.c.bf16 %v1080, %v1080
        %1082 = vrot.lane.b32.xlu0 %v786, 48
        %v1083 = vpop.permute.xlu0 %1082
        %v1085 = vsel %vm790, %v1081, 0
        %v1088 = vsel %vm854, %v1083, 0
        %1090 = vmatprep.subr.bf16.mxu0 0
        %1091 = vmatpush1.bf16.msra.mxu0 0
        %1092 = vmatprep.subr.bf16.mxu0 0
        %1093 = vmatpush1.bf16.msra.mxu0 0
        %1094 = vmatprep.subr.bf16.mxu0 0
        %1095 = vmatpush1.bf16.msra.mxu0 0
        %1096 = vmatprep.subr.bf16.mxu0 0
        %1097 = vmatpush1.bf16.msra.mxu0 0
        %1098 = vmatprep.subr.bf16.mxu0 0
        %1099 = vmatpush1.bf16.msra.mxu0 0
        %1100 = vmatprep.subr.bf16.mxu0 0
        %1101 = vmatpush1.bf16.msra.mxu0 0
        %1102 = vmatprep.subr.bf16.mxu0 0
        %1103 = vmatpush1.bf16.msra.mxu0 0
        %1104 = vmatprep.subr.bf16.mxu0 0
        %1105 = vmatpush1.bf16.msra.mxu0 %v1088
        %1106 = vmatprep.subr.bf16.mxu0 0
        %1107 = vmatpush2.bf16.msra.mxu0 0
        %1108 = vmatprep.subr.bf16.mxu0 0
        %1109 = vmatpush2.bf16.msra.mxu0 0
        %1110 = vmatprep.subr.bf16.mxu0 0
        %1111 = vmatpush2.bf16.msra.mxu0 0
        %1112 = vmatprep.subr.bf16.mxu0 0
        %1113 = vmatpush2.bf16.msra.mxu0 0
        %1114 = vmatprep.subr.bf16.mxu0 0
        %1115 = vmatpush2.bf16.msra.mxu0 0
        %1116 = vmatprep.subr.bf16.mxu0 0
        %1117 = vmatpush2.bf16.msra.mxu0 0
        %1118 = vmatprep.subr.bf16.mxu0 0
        %1119 = vmatpush2.bf16.msra.mxu0 0
        %1120 = vmatprep.subr.bf16.mxu0 0
        %1121 = vmatpush2.bf16.msra.mxu0 0
        %1122 = vmatprep.mubr.bf16.mxu0 0
        %1123 = vmatmul.mubr.bf16.gmra.mxu0 %v1085
        %v1124 = vpop.f32.mrf.mxu0
        %v1125 = vadd.f32 0.0, %v1124
        %v1126 = vpop.f32.mrf.mxu0
        %v1127 = vpop.f32.mrf.mxu0
        %v1128 = vpop.f32.mrf.mxu0
        %1129 = vdwg.mxu0
        %v1130 = vpack.c.bf16 %v1125, %v1125
        %v1132 = vunpack.c.l.b16 %v1130
        %v1133 = vpack.c.b16 %v1132, %v1132
        %1134 = vrot.lane.b32.xlu0 %v1133, 16
        %v1135 = vpop.permute.xlu0 %1134
        %vm1137 = vcmask 191616
        %1138 = vst.msk [vmem:[#allocation2] sm:$0xf] %vm1137, %v1135
        %1139 = vrot.lane.b32.xlu0 %v786, 104
        %v1140 = vpop.permute.xlu0 %1139
        %1141 = vrot.lane.b32.xlu0 %v786, 72
        %v1142 = vpop.permute.xlu0 %1141
        %v1144 = vsel %vm790, %v1140, 0
        %v1147 = vsel %vm790, %v1142, 0
        %1149 = vmatprep.subr.bf16.mxu0 0
        %1150 = vmatpush1.bf16.xpose.msra.mxu0 0
        %1151 = vmatprep.subr.bf16.mxu0 0
        %1152 = vmatpush1.bf16.xpose.msra.mxu0 0
        %1153 = vmatprep.subr.bf16.mxu0 0
        %1154 = vmatpush1.bf16.xpose.msra.mxu0 0
        %1155 = vmatprep.subr.bf16.mxu0 0
        %1156 = vmatpush1.bf16.xpose.msra.mxu0 0
        %1157 = vmatprep.subr.bf16.mxu0 0
        %1158 = vmatpush1.bf16.xpose.msra.mxu0 0
        %1159 = vmatprep.subr.bf16.mxu0 0
        %1160 = vmatpush1.bf16.xpose.msra.mxu0 0
        %1161 = vmatprep.subr.bf16.mxu0 0
        %1162 = vmatpush1.bf16.xpose.msra.mxu0 0
        %1163 = vmatprep.subr.bf16.mxu0 0
        %1164 = vmatpush1.bf16.xpose.msra.mxu0 %v1147
        %1165 = vmatprep.subr.bf16.mxu0 0
        %1166 = vmatpush2.bf16.xpose.msra.mxu0 0
        %1167 = vmatprep.subr.bf16.mxu0 0
        %1168 = vmatpush2.bf16.xpose.msra.mxu0 0
        %1169 = vmatprep.subr.bf16.mxu0 0
        %1170 = vmatpush2.bf16.xpose.msra.mxu0 0
        %1171 = vmatprep.subr.bf16.mxu0 0
        %1172 = vmatpush2.bf16.xpose.msra.mxu0 0
        %1173 = vmatprep.subr.bf16.mxu0 0
        %1174 = vmatpush2.bf16.xpose.msra.mxu0 0
        %1175 = vmatprep.subr.bf16.mxu0 0
        %1176 = vmatpush2.bf16.xpose.msra.mxu0 0
        %1177 = vmatprep.subr.bf16.mxu0 0
        %1178 = vmatpush2.bf16.xpose.msra.mxu0 0
        %1179 = vmatprep.subr.bf16.mxu0 0
        %1180 = vmatpush2.bf16.xpose.msra.mxu0 0
        %1181 = vmatprep.mubr.bf16.mxu0 0
        %1182 = vmatmul.mubr.bf16.gmra.mxu0 %v1144
        %v1183 = vpop.f32.mrf.mxu0
        %v1184 = vadd.f32 0.0, %v1183
        %v1185 = vpop.f32.mrf.mxu0
        %v1186 = vpop.f32.mrf.mxu0
        %v1187 = vpop.f32.mrf.mxu0
        %1188 = vdwg.mxu0
        %v1189 = vsel %vm790, %v1184, -inf
        %1190 = vmax.xlane.f32.xlu0 %v1189
        %v1191 = vpop.xlane.xlu0 %1190
        %v1192 = vsub.f32 %v1184, %v1191
        %v1193 = vmul.f32 %v1192, 1.442695
        %v1194 = vpow.pop %v1193
        %v1195 = vsel %vm790, %v1194, 0.0
        %1196 = vadd.xlane.f32.xlu0 %v1195
        %v1197 = vpop.xlane.xlu0 %1196
        %v1198 = vrcp.pop %v1197
        %v1199 = vmul.f32 %v1194, %v1198
        %v1200 = vpack.c.bf16 %v1199, %v1199
        %1201 = vrot.lane.b32.xlu0 %v786, 40
        %v1202 = vpop.permute.xlu0 %1201
        %v1204 = vsel %vm790, %v1200, 0
        %v1207 = vsel %vm854, %v1202, 0
        %1209 = vmatprep.subr.bf16.mxu0 0
        %1210 = vmatpush1.bf16.msra.mxu0 0
        %1211 = vmatprep.subr.bf16.mxu0 0
        %1212 = vmatpush1.bf16.msra.mxu0 0
        %1213 = vmatprep.subr.bf16.mxu0 0
        %1214 = vmatpush1.bf16.msra.mxu0 0
        %1215 = vmatprep.subr.bf16.mxu0 0
        %1216 = vmatpush1.bf16.msra.mxu0 0
        %1217 = vmatprep.subr.bf16.mxu0 0
        %1218 = vmatpush1.bf16.msra.mxu0 0
        %1219 = vmatprep.subr.bf16.mxu0 0
        %1220 = vmatpush1.bf16.msra.mxu0 0
        %1221 = vmatprep.subr.bf16.mxu0 0
        %1222 = vmatpush1.bf16.msra.mxu0 0
        %1223 = vmatprep.subr.bf16.mxu0 0
        %1224 = vmatpush1.bf16.msra.mxu0 %v1207
        %1225 = vmatprep.subr.bf16.mxu0 0
        %1226 = vmatpush2.bf16.msra.mxu0 0
        %1227 = vmatprep.subr.bf16.mxu0 0
        %1228 = vmatpush2.bf16.msra.mxu0 0
        %1229 = vmatprep.subr.bf16.mxu0 0
        %1230 = vmatpush2.bf16.msra.mxu0 0
        %1231 = vmatprep.subr.bf16.mxu0 0
        %1232 = vmatpush2.bf16.msra.mxu0 0
        %1233 = vmatprep.subr.bf16.mxu0 0
        %1234 = vmatpush2.bf16.msra.mxu0 0
        %1235 = vmatprep.subr.bf16.mxu0 0
        %1236 = vmatpush2.bf16.msra.mxu0 0
        %1237 = vmatprep.subr.bf16.mxu0 0
        %1238 = vmatpush2.bf16.msra.mxu0 0
        %1239 = vmatprep.subr.bf16.mxu0 0
        %1240 = vmatpush2.bf16.msra.mxu0 0
        %1241 = vmatprep.mubr.bf16.mxu0 0
        %1242 = vmatmul.mubr.bf16.gmra.mxu0 %v1204
        %v1243 = vpop.f32.mrf.mxu0
        %v1244 = vadd.f32 0.0, %v1243
        %v1245 = vpop.f32.mrf.mxu0
        %v1246 = vpop.f32.mrf.mxu0
        %v1247 = vpop.f32.mrf.mxu0
        %1248 = vdwg.mxu0
        %v1249 = vpack.c.bf16 %v1244, %v1244
        %v1251 = vunpack.c.l.b16 %v1249
        %v1252 = vpack.c.b16 %v1251, %v1251
        %1253 = vrot.lane.b32.xlu0 %v1252, 24
        %v1254 = vpop.permute.xlu0 %1253
        %vm1256 = vcmask 257216
        %1257 = vst.msk [vmem:[#allocation2] sm:$0xf] %vm1256, %v1254
        %v1258 = vld [vmem:[#allocation2] sm:$0xf]
        %v1259 = vld [vmem:[%s653] sm:$0xf]
        %v1260 = vld [vmem:[%s653 + $0x4] sm:$0xf]
        %v1261 = vld [vmem:[%s653 + $0x8] sm:$0xf]
        %v1262 = vld [vmem:[%s653 + $0xc] sm:$0xf]
        %v1263 = vld [vmem:[%s656] sm:$0x1]
        %v1265 = vlaneseq
        %v1266 = vshrl.u32 %v1265, 7
        %v1267 = vsub.s32 0, %v1266
        %v1268 = vrot.slane %v1263, %v1267
        %v1274 = vunpack.c.l.b16 %v1259
        %v1275 = vunpack.c.l.b16 %v1260
        %v1276 = vunpack.c.l.b16 %v1261
        %v1277 = vunpack.c.l.b16 %v1262
        %v1278 = vpack.c.b16 %v1275, %v1274
        %v1279 = vpack.c.b16 %v1277, %v1276
        %v1283 = vsel %vm690, %v1258, 0
        %1285 = vmatprep.subr.bf16.mxu0 0
        %1286 = vmatpush1.bf16.msra.mxu0 0
        %1287 = vmatprep.subr.bf16.mxu0 0
        %1288 = vmatpush1.bf16.msra.mxu0 0
        %1289 = vmatprep.subr.bf16.mxu0 0
        %1290 = vmatpush1.bf16.msra.mxu0 0
        %1291 = vmatprep.subr.bf16.mxu0 0
        %1292 = vmatpush1.bf16.msra.mxu0 0
        %1293 = vmatprep.subr.bf16.mxu0 0
        %1294 = vmatpush1.bf16.msra.mxu0 0
        %1295 = vmatprep.subr.bf16.mxu0 0
        %1296 = vmatpush1.bf16.msra.mxu0 0
        %1297 = vmatprep.subr.bf16.mxu0 0
        %1298 = vmatpush1.bf16.msra.mxu0 %v1279
        %1299 = vmatprep.subr.bf16.mxu0 0
        %1300 = vmatpush1.bf16.msra.mxu0 %v1278
        %1301 = vmatprep.subr.bf16.mxu0 0
        %1302 = vmatpush2.bf16.msra.mxu0 0
        %1303 = vmatprep.subr.bf16.mxu0 0
        %1304 = vmatpush2.bf16.msra.mxu0 0
        %1305 = vmatprep.subr.bf16.mxu0 0
        %1306 = vmatpush2.bf16.msra.mxu0 0
        %1307 = vmatprep.subr.bf16.mxu0 0
        %1308 = vmatpush2.bf16.msra.mxu0 0
        %1309 = vmatprep.subr.bf16.mxu0 0
        %1310 = vmatpush2.bf16.msra.mxu0 0
        %1311 = vmatprep.subr.bf16.mxu0 0
        %1312 = vmatpush2.bf16.msra.mxu0 0
        %1313 = vmatprep.subr.bf16.mxu0 0
        %1314 = vmatpush2.bf16.msra.mxu0 0
        %1315 = vmatprep.subr.bf16.mxu0 0
        %1316 = vmatpush2.bf16.msra.mxu0 0
        %1317 = vmatprep.mubr.bf16.mxu0 0
        %1318 = vmatmul.mubr.bf16.gmra.mxu0 %v1283
        %v1319 = vpop.f32.mrf.mxu0
        %v1320 = vadd.f32 %v1268, %v1319
        %v1321 = vpop.f32.mrf.mxu0
        %v1322 = vpop.f32.mrf.mxu0
        %v1323 = vpop.f32.mrf.mxu0
        %1324 = vdwg.mxu0
        %v1325 = vadd.f32 %v687, %v1320
        %v1326 = vld [vmem:[%s659] sm:$0x1]
        %v1327 = vld [vmem:[%s662] sm:$0x1]
        %v1328 = vsel %vm690, %v1325, 0.0
        %1329 = vadd.xlane.f32.xlu0 %v1328
        %v1330 = vpop.xlane.xlu0 %1329
        %v1331 = vmul.f32 %v1330, %v694
        %v1332 = vsub.f32 %v1325, %v1331
        %v1333 = vmul.f32 %v1332, %v1332
        %v1334 = vsel %vm690, %v1333, 0.0
        %1335 = vadd.xlane.f32.xlu0 %v1334
        %v1336 = vpop.xlane.xlu0 %1335
        %v1337 = vmul.f32 %v1336, %v694
        %v1338 = vadd.f32 %v1337, 1e-05
        %v1339 = vrsqrt.pop %v1338
        %v1340 = vmul.f32 %v1332, %v1339
        %v1342 = vlaneseq
        %v1343 = vshrl.u32 %v1342, 7
        %v1344 = vsub.s32 0, %v1343
        %v1345 = vrot.slane %v1326, %v1344
        %v1347 = vmul.f32 %v1340, %v1345
        %v1349 = vlaneseq
        %v1350 = vshrl.u32 %v1349, 7
        %v1351 = vsub.s32 0, %v1350
        %v1352 = vrot.slane %v1327, %v1351
        %v1354 = vadd.f32 %v1347, %v1352
        %v1355 = vpack.c.bf16 %v1354, %v1354
        %v1356 = vld [vmem:[%s670] sm:$0x1]
        %v1357 = vld [vmem:[%s667] sm:$0xf]
        %v1358 = vld [vmem:[%s667 + $0x4] sm:$0xf]
        %v1359 = vld [vmem:[%s667 + $0x8] sm:$0xf]
        %v1360 = vld [vmem:[%s667 + $0xc] sm:$0xf]
        %v1362 = vlaneseq
        %v1363 = vshrl.u32 %v1362, 7
        %v1364 = vsub.s32 0, %v1363
        %v1365 = vrot.slane %v1356, %v1364
        %v1371 = vunpack.c.l.b16 %v1357
        %v1372 = vunpack.c.l.b16 %v1358
        %v1373 = vunpack.c.l.b16 %v1359
        %v1374 = vunpack.c.l.b16 %v1360
        %v1375 = vpack.c.b16 %v1372, %v1371
        %v1376 = vpack.c.b16 %v1374, %v1373
        %v1380 = vsel %vm690, %v1355, 0
        %1382 = vmatprep.subr.bf16.mxu0 0
        %1383 = vmatpush1.bf16.msra.mxu0 0
        %1384 = vmatprep.subr.bf16.mxu0 0
        %1385 = vmatpush1.bf16.msra.mxu0 0
        %1386 = vmatprep.subr.bf16.mxu0 0
        %1387 = vmatpush1.bf16.msra.mxu0 0
        %1388 = vmatprep.subr.bf16.mxu0 0
        %1389 = vmatpush1.bf16.msra.mxu0 0
        %1390 = vmatprep.subr.bf16.mxu0 0
        %1391 = vmatpush1.bf16.msra.mxu0 0
        %1392 = vmatprep.subr.bf16.mxu0 0
        %1393 = vmatpush1.bf16.msra.mxu0 0
        %1394 = vmatprep.subr.bf16.mxu0 0
        %1395 = vmatpush1.bf16.msra.mxu0 %v1376
        %1396 = vmatprep.subr.bf16.mxu0 0
        %1397 = vmatpush1.bf16.msra.mxu0 %v1375
        %1398 = vmatprep.subr.bf16.mxu0 0
        %1399 = vmatpush2.bf16.msra.mxu0 0
        %1400 = vmatprep.subr.bf16.mxu0 0
        %1401 = vmatpush2.bf16.msra.mxu0 0
        %1402 = vmatprep.subr.bf16.mxu0 0
        %1403 = vmatpush2.bf16.msra.mxu0 0
        %1404 = vmatprep.subr.bf16.mxu0 0
        %1405 = vmatpush2.bf16.msra.mxu0 0
        %1406 = vmatprep.subr.bf16.mxu0 0
        %1407 = vmatpush2.bf16.msra.mxu0 0
        %1408 = vmatprep.subr.bf16.mxu0 0
        %1409 = vmatpush2.bf16.msra.mxu0 0
        %1410 = vmatprep.subr.bf16.mxu0 0
        %1411 = vmatpush2.bf16.msra.mxu0 0
        %1412 = vmatprep.subr.bf16.mxu0 0
        %1413 = vmatpush2.bf16.msra.mxu0 0
        %1414 = vmatprep.mubr.bf16.mxu0 0
        %1415 = vmatmul.mubr.bf16.gmra.mxu0 %v1380
        %v1416 = vpop.f32.mrf.mxu0
        %v1417 = vadd.f32 %v1365, %v1416
        %v1418 = vpop.f32.mrf.mxu0
        %v1419 = vpop.f32.mrf.mxu0
        %v1420 = vpop.f32.mrf.mxu0
        %1421 = vdwg.mxu0
        %v1422 = vmul.f32 %v1417, 1.702
        %v1423 = vxor.u32 %v1422, 2147483648
        %v1424 = vmul.f32 %v1423, 1.442695
        %v1425 = vpow.pop %v1424
        %v1426 = vadd.f32 %v1425, 1.0
        %v1427 = vrcp.pop %v1426
        %v1428 = vmul.f32 1.0, %v1427
        %v1429 = vmul.f32 %v1417, %v1428
        %v1430 = vpack.c.bf16 %v1429, %v1429
        %v1431 = vld [vmem:[%s675] sm:$0xf]
        %v1432 = vld [vmem:[%s675 + $0x4] sm:$0xf]
        %v1433 = vld [vmem:[%s675 + $0x8] sm:$0xf]
        %v1434 = vld [vmem:[%s675 + $0xc] sm:$0xf]
        %v1435 = vld [vmem:[%s675 + $0x10] sm:$0xf]
        %v1436 = vld [vmem:[%s675 + $0x14] sm:$0xf]
        %v1437 = vld [vmem:[%s675 + $0x18] sm:$0xf]
        %v1438 = vld [vmem:[%s675 + $0x1c] sm:$0xf]
        %v1439 = vld [vmem:[%s675 + $0x20] sm:$0xf]
        %v1440 = vld [vmem:[%s675 + $0x24] sm:$0xf]
        %v1441 = vld [vmem:[%s675 + $0x28] sm:$0xf]
        %v1442 = vld [vmem:[%s675 + $0x2c] sm:$0xf]
        %v1443 = vld [vmem:[%s675 + $0x30] sm:$0xf]
        %v1444 = vld [vmem:[%s675 + $0x34] sm:$0xf]
        %v1445 = vld [vmem:[%s675 + $0x38] sm:$0xf]
        %v1446 = vld [vmem:[%s675 + $0x3c] sm:$0xf]
        %v1463 = vunpack.c.l.b16 %v1431
        %v1464 = vunpack.c.l.b16 %v1432
        %v1465 = vunpack.c.l.b16 %v1433
        %v1466 = vunpack.c.l.b16 %v1434
        %v1467 = vunpack.c.l.b16 %v1435
        %v1468 = vunpack.c.l.b16 %v1436
        %v1469 = vunpack.c.l.b16 %v1437
        %v1470 = vunpack.c.l.b16 %v1438
        %v1471 = vunpack.c.l.b16 %v1439
        %v1472 = vunpack.c.l.b16 %v1440
        %v1473 = vunpack.c.l.b16 %v1441
        %v1474 = vunpack.c.l.b16 %v1442
        %v1475 = vunpack.c.l.b16 %v1443
        %v1476 = vunpack.c.l.b16 %v1444
        %v1477 = vunpack.c.l.b16 %v1445
        %v1478 = vunpack.c.l.b16 %v1446
        %v1479 = vpack.c.b16 %v1464, %v1463
        %v1480 = vpack.c.b16 %v1466, %v1465
        %v1481 = vpack.c.b16 %v1468, %v1467
        %v1482 = vpack.c.b16 %v1470, %v1469
        %v1483 = vpack.c.b16 %v1472, %v1471
        %v1484 = vpack.c.b16 %v1474, %v1473
        %v1485 = vpack.c.b16 %v1476, %v1475
        %v1486 = vpack.c.b16 %v1478, %v1477
        %1495 = vmatprep.subr.bf16.mxu0 0
        %1496 = vmatpush1.bf16.msra.mxu0 %v1486
        %1497 = vmatprep.subr.bf16.mxu0 0
        %1498 = vmatpush1.bf16.msra.mxu0 %v1485
        %1499 = vmatprep.subr.bf16.mxu0 0
        %1500 = vmatpush1.bf16.msra.mxu0 %v1484
        %1501 = vmatprep.subr.bf16.mxu0 0
        %1502 = vmatpush1.bf16.msra.mxu0 %v1483
        %1503 = vmatprep.subr.bf16.mxu0 0
        %1504 = vmatpush1.bf16.msra.mxu0 %v1482
        %1505 = vmatprep.subr.bf16.mxu0 0
        %1506 = vmatpush1.bf16.msra.mxu0 %v1481
        %1507 = vmatprep.subr.bf16.mxu0 0
        %1508 = vmatpush1.bf16.msra.mxu0 %v1480
        %1509 = vmatprep.subr.bf16.mxu0 0
        %1510 = vmatpush1.bf16.msra.mxu0 %v1479
        %1511 = vmatprep.subr.bf16.mxu0 0
        %1512 = vmatpush2.bf16.msra.mxu0 0
        %1513 = vmatprep.subr.bf16.mxu0 0
        %1514 = vmatpush2.bf16.msra.mxu0 0
        %1515 = vmatprep.subr.bf16.mxu0 0
        %1516 = vmatpush2.bf16.msra.mxu0 0
        %1517 = vmatprep.subr.bf16.mxu0 0
        %1518 = vmatpush2.bf16.msra.mxu0 0
        %1519 = vmatprep.subr.bf16.mxu0 0
        %1520 = vmatpush2.bf16.msra.mxu0 0
        %1521 = vmatprep.subr.bf16.mxu0 0
        %1522 = vmatpush2.bf16.msra.mxu0 0
        %1523 = vmatprep.subr.bf16.mxu0 0
        %1524 = vmatpush2.bf16.msra.mxu0 0
        %1525 = vmatprep.subr.bf16.mxu0 0
        %1526 = vmatpush2.bf16.msra.mxu0 0
        %1527 = vmatprep.mubr.bf16.mxu0 0
        %1528 = vmatmul.mubr.bf16.gmra.mxu0 %v1430
        %v1529 = vpop.f32.mrf.mxu0
        %v1530 = vadd.f32 0.0, %v1529
        %v1531 = vpop.f32.mrf.mxu0
        %v1532 = vpop.f32.mrf.mxu0
        %v1533 = vpop.f32.mrf.mxu0
        %1534 = vdwg.mxu0
        %v1535 = vadd.f32 %v1325, %v1530
        %v1536 = vld [vmem:[%s678] sm:$0x1]
        %v1538 = vlaneseq
        %v1539 = vshrl.u32 %v1538, 7
        %v1540 = vsub.s32 0, %v1539
        %v1541 = vrot.slane %v1536, %v1540
        %v1543 = vadd.f32 %v1535, %v1541
        %1544 = vst.msk [vmem:[%s624] sm:$0xff] %vm690, %v1543
        %vm1545 = vcmask 253952
        %1546 = vst.msk [vmem:[%s630] sm:$0x1] %vm1545, %v1543
        %s1547 = sand.u32 %s390, 1
        %s1548 = scalar_lea.sflag [#allocation4], %s1547
        %s1549 = sand.u32 %s390, 1
        %s1550 = smul.addr %s1549, 8
        %s1551 = scalar_lea.vmem [#allocation3], %s1550
        %s1552 = sand.u32 %s418, 1
        %s1553 = scalar_lea.sflag [#allocation6], %s1552
        %s1554 = sand.u32 %s418, 1
        %s1555 = scalar_lea.vmem [#allocation5], %s1554
        // Predicated region
        $region77: #{tpu_custom_call.1} parent=71 // pred_check
          %p1556 = pneg %p400
        $region78: #{tpu_custom_call.1} parent=71 // pred_check_branch
          %1558 = sbr.rel (%p1556) target = $region80
        $region79: #{tpu_custom_call.1} parent=71 // pred_region
          %s1560 = ssub.s32 128, 128
          %1561 = vsyncadd %s1548, %s1560
          %s1562 = smul.addr %s36, 128
          %s1563 = scalar_lea.hbm %s13, %s1562
          %s1565 = sshll.u32 %s1551, 4
          %s1566 = int_to_ptr.vmem [resolvable:$true] %s1565
          %1568 = dma.vmem_to_hbm [thread:$0]  %s1566, 128, %s1563, %s1548
        $region80: #{tpu_custom_call.1} parent=71 // pred_fallthru
          _
        // Predicated region
        $region81: #{tpu_custom_call.1} parent=71 // pred_check
          %p1569 = pneg %p428
        $region82: #{tpu_custom_call.1} parent=71 // pred_check_branch
          %1571 = sbr.rel (%p1569) target = $region84
        $region83: #{tpu_custom_call.1} parent=71 // pred_region
          %s1573 = ssub.s32 16, 16
          %1574 = vsyncadd %s1553, %s1573
          %s1575 = smul.addr %s37, 2
          %s1576 = sadd.s32 %s36, %s1575
          %s1577 = smul.addr %s1576, 16
          %s1578 = scalar_lea.hbm %s14, %s1577
          %s1580 = sshll.u32 %s1555, 4
          %s1581 = int_to_ptr.vmem [resolvable:$true] %s1580
          %1583 = dma.vmem_to_hbm [thread:$0]  %s1581, 16, %s1578, %s1553
        $region84: #{tpu_custom_call.1} parent=71 // pred_fallthru
          _
      $region72: #{tpu_custom_call.1} parent=5 // pred_fallthru
        _
      %p1584 = scmp.le.s32.totalorder 2, %s27
      // Predicated region
      $region85: #{tpu_custom_call.1} parent=5 // pred_check
        %p1585 = pneg %p1584
      $region86: #{tpu_custom_call.1} parent=5 // pred_check_branch
        %1587 = sbr.rel (%p1585) target = $region88
      $region87: #{tpu_custom_call.1} parent=5 // pred_region
        %s1588 = ssub.s32 %s27, 2
        // Predicated region
        $region89: #{tpu_custom_call.1} parent=87 // pred_check
          %p1589 = pneg %p406
        $region90: #{tpu_custom_call.1} parent=87 // pred_check_branch
          %1591 = sbr.rel (%p1589) target = $region92
        $region91: #{tpu_custom_call.1} parent=87 // pred_region
          %s1592 = sand.u32 %s391, 1
          %s1593 = scalar_lea.sflag [#allocation4], %s1592
          %s1594 = sand.u32 %s391, 1
          %s1595 = smul.addr %s1594, 8
          %s1596 = scalar_lea.vmem [#allocation3], %s1595
          %1597 = dma.done %s1593, 128
        $region92: #{tpu_custom_call.1} parent=87 // pred_fallthru
          _
        // Predicated region
        $region93: #{tpu_custom_call.1} parent=87 // pred_check
          %p1598 = pneg %p434
        $region94: #{tpu_custom_call.1} parent=87 // pred_check_branch
          %1600 = sbr.rel (%p1598) target = $region96
        $region95: #{tpu_custom_call.1} parent=87 // pred_region
          %s1601 = sand.u32 %s419, 1
          %s1602 = scalar_lea.sflag [#allocation6], %s1601
          %s1603 = sand.u32 %s419, 1
          %s1604 = scalar_lea.vmem [#allocation5], %s1603
          %1605 = dma.done %s1602, 16
        $region96: #{tpu_custom_call.1} parent=87 // pred_fallthru
          _
      $region88: #{tpu_custom_call.1} parent=5 // pred_fallthru
        _
    $region6: #{tpu_custom_call.1} parent=1 // loop_footer
      %s31 = sadd.s32 1, %s27
    $region7: #{tpu_custom_call.1} parent=1 // loop_footer_branch
      %26 = sbr.rel target = $region3
    $region8: #{tpu_custom_call.1} parent=1 // loop_exit
      _
    %1606 = vsyncpa [#allocation4], 1
    %s1607 = scalar_lea.sflag [#allocation4], 1
    %1608 = vsyncpa %s1607, 1
    %1609 = vsyncpa [#allocation6], 1
    %s1610 = scalar_lea.sflag [#allocation6], 1
    %1611 = vsyncpa %s1610, 1

</llo_original>
